<compile_context>
chip_gen: v7x
topology: tpu7x:2x2x1
jax: 0.10.0
libtpu: 0.0.40
codegen_flags: <defaults>
</compile_context>

<pallas_src>
import functools

import jax
import jax.numpy as jnp
from jax import lax
from jax.experimental import pallas as pl
from jax.experimental.pallas import tpu as pltpu


# --------------------------------------------------------------------------- #
# 1) Linear: y = x @ W^T + b    (W in torch [out, in] layout, contracted trans_b)
#    grid (M/tm, N/tn, K/tk), K innermost ("arbitrary"), f32 VMEM accumulator.
# --------------------------------------------------------------------------- #
def _linear_kernel(x_ref, w_ref, b_ref, o_ref, acc_ref):
    @pl.when(pl.program_id(2) == 0)
    def _():
        acc_ref[...] = jnp.zeros_like(acc_ref)

    acc_ref[...] += lax.dot_general(
        x_ref[...], w_ref[...],
        dimension_numbers=(((1,), (1,)), ((), ())),      # x (tm,tk) @ w (tn,tk)^T
        preferred_element_type=jnp.float32,
    )

    @pl.when(pl.program_id(2) == pl.num_programs(2) - 1)
    def _():
        o_ref[...] = (acc_ref[...] + b_ref[...].astype(jnp.float32)).astype(o_ref.dtype)


def _linear(x2d, weight, bias, *, tm, tn, tk):
    M, K = x2d.shape
    N = weight.shape[0]
    tm_eff = min(tm, M)
    tn_eff = N if N <= tn else tn
    tk_eff = tk if K % tk == 0 else K      # never pad K: padding would pollute the accumulator
    grid = (pl.cdiv(M, tm_eff), pl.cdiv(N, tn_eff), K // tk_eff)
    return pl.pallas_call(
        _linear_kernel,
        out_shape=jax.ShapeDtypeStruct((M, N), x2d.dtype),
        grid_spec=pltpu.PrefetchScalarGridSpec(
            num_scalar_prefetch=0,
            grid=grid,
            in_specs=[
                pl.BlockSpec((tm_eff, tk_eff), lambda i, j, k: (i, k)),
                pl.BlockSpec((tn_eff, tk_eff), lambda i, j, k: (j, k)),
                pl.BlockSpec((1, tn_eff), lambda i, j, k: (0, j)),
            ],
            out_specs=pl.BlockSpec((tm_eff, tn_eff), lambda i, j, k: (i, j)),
            scratch_shapes=[pltpu.VMEM((tm_eff, tn_eff), jnp.float32)],
        ),
        compiler_params=pltpu.CompilerParams(
            dimension_semantics=("parallel", "parallel", "arbitrary")),
    )(x2d, weight, bias.reshape(1, N))


# --------------------------------------------------------------------------- #
# 2) Flash-style attention core: grid (B, H, q-blocks, k-blocks), online softmax.
#    mask / bias inputs are optional (static flags) and broadcast via index_map.
# --------------------------------------------------------------------------- #
def _flash_attn_kernel(*refs, have_mask, have_bias):
    idx = 0
    if have_mask:
        kpm_ref = refs[idx]; idx += 1
    if have_bias:
        bias_ref = refs[idx]; idx += 1
    q_ref, k_ref, v_ref, o_ref, m_sc, l_sc, acc_sc = refs[idx:]

    kv = pl.program_id(3)

    @pl.when(kv == 0)
    def _():
        m_sc[...] = jnp.full_like(m_sc, -jnp.inf)
        l_sc[...] = jnp.zeros_like(l_sc)
        acc_sc[...] = jnp.zeros_like(acc_sc)

    q = q_ref[0, 0]                                   # (tq, D); q-scaling folded into W_q/b_q
    k = k_ref[0, 0]                                   # (tk, D)
    s = lax.dot_general(q, k, (((1,), (1,)), ((), ())),
                        preferred_element_type=jnp.float32)       # (tq, tk)
    if have_bias:
        s = s + bias_ref[0, 0].astype(jnp.float32)
    if have_mask:
        s = jnp.where(kpm_ref[0] != 0, -jnp.inf, s)   # key_padding_mask: 1 == pad

    m_prev = m_sc[...]
    m_new = jnp.maximum(m_prev, jnp.max(s, axis=-1, keepdims=True))
    # Rows whose keys so far are all masked (-inf) keep exactly zero probability mass
    # (no NaN), so later unmasked key blocks still contribute correctly.  Rows masked
    # across *every* block end with l == 0 -> NaN after the final normalisation,
    # matching PyTorch's softmax-of-all-(-inf) (the NaN is scrubbed after out_proj).
    m_safe = jnp.where(m_new == -jnp.inf, jnp.float32(0.0), m_new)
    alpha = jnp.exp(m_prev - m_safe)
    p = jnp.exp(s - m_safe)
    # TODO(synk): attention-prob dropout is identity here (inference path).
    l_sc[...] = alpha * l_sc[...] + jnp.sum(p, axis=-1, keepdims=True)
    acc_sc[...] = alpha * acc_sc[...] + lax.dot_general(
        p.astype(v_ref.dtype), v_ref[0, 0], (((1,), (0,)), ((), ())),
        preferred_element_type=jnp.float32)
    m_sc[...] = m_new

    @pl.when(kv == pl.num_programs(3) - 1)
    def _():
        inv_l = pl.reciprocal(l_sc[...], approx=True)             # EUP, not VALU
        o_ref[0, 0] = (acc_sc[...] * inv_l).astype(o_ref.dtype)


# --------------------------------------------------------------------------- #
# 3) Out projection + NaN-zeroing + residual + LayerNorm, fused, row-tiled.
# --------------------------------------------------------------------------- #
def _out_proj_ln_kernel(a_ref, w_ref, b_ref, res_ref, g_ref, bt_ref, o_ref, *, eps):
    y = lax.dot_general(
        a_ref[...], w_ref[...],
        dimension_numbers=(((1,), (1,)), ((), ())),
        preferred_element_type=jnp.float32,
    )
    y = y + b_ref[...].astype(jnp.float32)
    y = jnp.where(y != y, jnp.float32(0.0), y)        # x[x != x] = 0
    # TODO(synk): hidden dropout is identity here (inference path).
    y = res_ref[...].astype(jnp.float32) + y          # residual
    mu = jnp.mean(y, axis=-1, keepdims=True)
    var = jnp.mean(jnp.square(y - mu), axis=-1, keepdims=True)
    y = (y - mu) * lax.rsqrt(var + jnp.float32(eps))
    y = y * g_ref[...].astype(jnp.float32) + bt_ref[...].astype(jnp.float32)
    o_ref[...] = y.astype(o_ref.dtype)


# --------------------------------------------------------------------------- #
# Wrapper
# --------------------------------------------------------------------------- #
@functools.partial(jax.jit,
                   static_argnames=("num_heads", "ln_eps", "block_m", "block_n",
                                    "block_k", "q_block", "k_block"))
def cocolm_attention(x, attention_mask, attn_bias,
                     in_proj_w, in_proj_b, out_proj_w, out_proj_b,
                     ln_gamma, ln_beta, *,
                     num_heads, ln_eps=1e-5,
                     block_m=256, block_n=512, block_k=512,
                     q_block=256, k_block=512):
    """x: [B, S, E]; attention_mask: [B, S] (1 = pad) or None;
    attn_bias: None, (S,S), (1,S,S), (H,S,S), (B*H,S,S) or (B|1, H|1, S, S).
    Returns [B, S, E] (attention weights are not returned)."""
    B, S, E = x.shape
    H = num_heads
    D = E // H
    M = B * S
    scaling = float(D) ** -0.5

    # Fold D**-0.5 into the q-slice of in_proj (torch [out, in] layout), once.
    w_in = in_proj_w.at[:E, :].multiply(scaling)
    b_in = in_proj_b.at[:E].multiply(scaling)

    x2d = x.reshape(M, E)

    # ---- in_proj (E -> 3E), K-tiled matmul with f32 accumulator ----
    qkv = _linear(x2d, w_in, b_in, tm=block_m, tn=block_n, tk=block_k)    # (M, 3E)

    # Split heads into (B, H, S, D): keeps D as a full minor dim so the per-head
    # BlockSpecs below are legal under the (8,128) tiling rule; XLA fuses these.
    q = qkv[:, :E].reshape(B, S, H, D).transpose(0, 2, 1, 3)
    k = qkv[:, E:2 * E].reshape(B, S, H, D).transpose(0, 2, 1, 3)
    v = qkv[:, 2 * E:].reshape(B, S, H, D).transpose(0, 2, 1, 3)

    have_mask = attention_mask is not None
    have_bias = attn_bias is not None

    # Key-axis tiles must divide S exactly (no garbage keys in the softmax sum).
    tq = q_block if S % q_block == 0 else S
    tk = k_block if S % k_block == 0 else S
    grid = (B, H, S // tq, S // tk)

    in_specs = []
    args = []
    if have_mask:
        kpm = attention_mask.astype(jnp.int32).reshape(B, 1, S)
        in_specs.append(pl.BlockSpec((1, 1, tk), lambda b, h, qi, ki: (b, 0, ki)))
        args.append(kpm)
    if have_bias:
        ab = jnp.asarray(attn_bias)
        if ab.ndim == 2:                               # (S, S)
            ab = ab.reshape(1, 1, S, S)
        elif ab.ndim == 3:
            lead = ab.shape[0]
            if lead == B * H:
                ab = ab.reshape(B, H, S, S)
            elif lead == H:
                ab = ab.reshape(1, H, S, S)
            elif lead == 1:
                ab = ab.reshape(1, 1, S, S)
            else:
                raise ValueError(f"attn_bias leading dim {lead} not broadcastable to {B * H}")
        elif ab.ndim != 4:
            raise ValueError("attn_bias must be 2-D, 3-D or 4-D")
        bias_has_batch = ab.shape[0] > 1
        bias_has_head = ab.shape[1] > 1

        def bias_map(b, h, qi, ki, _bb=bias_has_batch, _bh=bias_has_head):
            # Broadcast over batch / head via the index_map (no HBM broadcast).
            return (b if _bb else 0, h if _bh else 0, qi, ki)

        in_specs.append(pl.BlockSpec((1, 1, tq, tk), bias_map))
        args.append(ab)

    in_specs += [
        pl.BlockSpec((1, 1, tq, D), lambda b, h, qi, ki: (b, h, qi, 0)),   # q
        pl.BlockSpec((1, 1, tk, D), lambda b, h, qi, ki: (b, h, ki, 0)),   # k
        pl.BlockSpec((1, 1, tk, D), lambda b, h, qi, ki: (b, h, ki, 0)),   # v
    ]
    args += [q, k, v]

    attn = pl.pallas_call(
        functools.partial(_flash_attn_kernel, have_mask=have_mask, have_bias=have_bias),
        out_shape=jax.ShapeDtypeStruct((B, H, S, D), x.dtype),
        grid_spec=pltpu.PrefetchScalarGridSpec(
            num_scalar_prefetch=0,
            grid=grid,
            in_specs=in_specs,
            out_specs=pl.BlockSpec((1, 1, tq, D), lambda b, h, qi, ki: (b, h, qi, 0)),
            scratch_shapes=[pltpu.VMEM((tq, 1), jnp.float32),     # running max
                            pltpu.VMEM((tq, 1), jnp.float32),     # running sum
                            pltpu.VMEM((tq, D), jnp.float32)],    # running PV
        ),
        compiler_params=pltpu.CompilerParams(
            dimension_semantics=("parallel", "parallel", "parallel", "arbitrary")),
    )(*args)

    attn2d = attn.transpose(0, 2, 1, 3).reshape(M, E)             # merge heads

    # ---- out_proj + NaN-zero + residual + LayerNorm (fused, row-tiled) ----
    tm_out = min(block_m, M)
    out2d = pl.pallas_call(
        functools.partial(_out_proj_ln_kernel, eps=ln_eps),
        out_shape=jax.ShapeDtypeStruct((M, E), x.dtype),
        grid_spec=pltpu.PrefetchScalarGridSpec(
            num_scalar_prefetch=0,
            grid=(pl.cdiv(M, tm_out),),
            in_specs=[
                pl.BlockSpec((tm_out, E), lambda i: (i, 0)),      # attention rows
                pl.BlockSpec((E, E), lambda i: (0, 0)),           # out_proj weight (torch layout)
                pl.BlockSpec((1, E), lambda i: (0, 0)),           # out_proj bias
                pl.BlockSpec((tm_out, E), lambda i: (i, 0)),      # residual rows
                pl.BlockSpec((1, E), lambda i: (0, 0)),           # LN gamma
                pl.BlockSpec((1, E), lambda i: (0, 0)),           # LN beta
            ],
            out_specs=pl.BlockSpec((tm_out, E), lambda i: (i, 0)),
        ),
        compiler_params=pltpu.CompilerParams(dimension_semantics=("parallel",)),
    )(attn2d, out_proj_w, out_proj_b.reshape(1, E), x2d,
      ln_gamma.reshape(1, E), ln_beta.reshape(1, E))

    return out2d.reshape(B, S, E)


# --------------------------------------------------------------------------- #
# Reference (plain JAX, mirrors the PyTorch forward in eval mode)
# --------------------------------------------------------------------------- #
def _reference(x, mask, attn_bias, w_in, b_in, w_out, b_out, gamma, beta, H, eps):
    B, S, E = x.shape
    D = E // H
    scaling = float(D) ** -0.5
    qkv = x @ w_in.T + b_in
    q, k, v = jnp.split(qkv, 3, axis=-1)
    q = q.reshape(B, S, H, D).transpose(0, 2, 1, 3) * scaling
    k = k.reshape(B, S, H, D).transpose(0, 2, 1, 3)
    v = v.reshape(B, S, H, D).transpose(0, 2, 1, 3)
    s = jnp.einsum("bhqd,bhkd->bhqk", q, k)
    s = jnp.where(mask[:, None, None, :].astype(bool), -jnp.inf, s)
    s = s + attn_bias.reshape(B, H, S, S)
    m = jnp.max(s, axis=-1, keepdims=True)
    p = jnp.exp(s - m)
    p = p / jnp.sum(p, axis=-1, keepdims=True)
    o = jnp.einsum("bhqk,bhkd->bhqd", p, v)
    o = o.transpose(0, 2, 1, 3).reshape(B, S, E)
    o = o @ w_out.T + b_out
    o = jnp.where(o != o, 0.0, o)
    y = x + o
    mu = jnp.mean(y, axis=-1, keepdims=True)
    var = jnp.mean(jnp.square(y - mu), axis=-1, keepdims=True)
    y = (y - mu) * jax.lax.rsqrt(var + eps)
    return y * gamma + beta


if __name__ == "__main__":
    # Small COCOLM-ish config: batch=2, seq=8, hidden=32, heads=4 (head_dim=8).
    B, S, E, H = 2, 8, 32, 4
    eps = 1e-5

    key = jax.random.PRNGKey(0)
    kx, kb, kwi, kbi, kwo, kbo, kg, kbt = jax.random.split(key, 8)

    x = jax.random.normal(kx, (B, S, E), dtype=jnp.float32)
    attention_mask = jnp.zeros((B, S), dtype=jnp.int32).at[1, -2:].set(1)   # pad last 2 keys of batch 1
    attn_bias = 0.1 * jax.random.normal(kb, (B * H, S, S), dtype=jnp.float32)

    in_proj_w = 0.02 * jax.random.normal(kwi, (3 * E, E), dtype=jnp.float32)   # torch [out, in]
    in_proj_b = 0.02 * jax.random.normal(kbi, (3 * E,), dtype=jnp.float32)
    out_proj_w = 0.02 * jax.random.normal(kwo, (E, E), dtype=jnp.float32)
    out_proj_b = 0.02 * jax.random.normal(kbo, (E,), dtype=jnp.float32)
    ln_gamma = 1.0 + 0.02 * jax.random.normal(kg, (E,), dtype=jnp.float32)
    ln_beta = 0.02 * jax.random.normal(kbt, (E,), dtype=jnp.float32)

    # --- test 1: key padding mask + per-(batch,head) bias ---
    out = cocolm_attention(x, attention_mask, attn_bias,
                           in_proj_w, in_proj_b, out_proj_w, out_proj_b,
                           ln_gamma, ln_beta,
                           num_heads=H, ln_eps=eps)
    out = jax.block_until_ready(out)
    ref = _reference(x, attention_mask, attn_bias,
                     in_proj_w, in_proj_b, out_proj_w, out_proj_b,
                     ln_gamma, ln_beta, H, eps)
    assert out.shape == (B, S, E)
    assert jnp.allclose(out, ref, atol=2e-3, rtol=2e-3), "mismatch vs reference (mask+bias)"

    # --- test 2: no mask, no bias (static skip paths) ---
    out2 = cocolm_attention(x, None, None,
                            in_proj_w, in_proj_b, out_proj_w, out_proj_b,
                            ln_gamma, ln_beta,
                            num_heads=H, ln_eps=eps)
    out2 = jax.block_until_ready(out2)
    ref2 = _reference(x, jnp.zeros((B, S), jnp.int32), jnp.zeros((B * H, S, S), jnp.float32),
                      in_proj_w, in_proj_b, out_proj_w, out_proj_b,
                      ln_gamma, ln_beta, H, eps)
    assert jnp.allclose(out2, ref2, atol=2e-3, rtol=2e-3), "mismatch vs reference (no mask/bias)"

    print("KERNEL_OK")
</pallas_src>

<mosaic_0001>
module attributes {stable_mosaic.version = 11 : i64} {
  func.func @_linear_kernel(%arg0: i32, %arg1: i32, %arg2: i32, %arg3: memref<16x32xf32, #tpu.memory_space<vmem>>, %arg4: memref<96x32xf32, #tpu.memory_space<vmem>>, %arg5: memref<1x96xf32, #tpu.memory_space<vmem>>, %arg6: memref<16x96xf32, #tpu.memory_space<vmem>>, %arg7: memref<16x96xf32, #tpu.memory_space<vmem>>) attributes {dimension_semantics = [#tpu.dimension_semantics<parallel>, #tpu.dimension_semantics<parallel>, #tpu.dimension_semantics<arbitrary>], iteration_bounds = array<i64: 1, 1, 1>, scalar_prefetch = 0 : i64, scratch_operands = 1 : i64, tpu.core_type = #tpu.core_type<tc>, window_params = [{transform_indices = @transform_0, window_bounds = array<i64: 16, 32>}, {transform_indices = @transform_1, window_bounds = array<i64: 96, 32>}, {transform_indices = @transform_2, window_bounds = array<i64: 1, 96>}, {transform_indices = @transform_3, window_bounds = array<i64: 16, 96>}]} {
    %c0_i32 = arith.constant 0 : i32
    %0 = arith.cmpi eq, %arg2, %c0_i32 : i32
    %1 = arith.extui %0 : i1 to i32
    %c0_i32_0 = arith.constant 0 : i32
    %2 = arith.cmpi ne, %1, %c0_i32_0 : i32
    scf.if %2 {
      %cst_10 = arith.constant 0.000000e+00 : f32
      %12 = vector.broadcast %cst_10 : f32 to vector<16x96xf32>
      %c0_11 = arith.constant 0 : index
      %c0_12 = arith.constant 0 : index
      %13 = vector.load %arg7[%c0_11, %c0_12] : memref<16x96xf32, #tpu.memory_space<vmem>>, vector<16x96xf32>
      tpu.vector_store %arg7[%c0_11, %c0_12], %12 {strides = array<i32>} : memref<16x96xf32, #tpu.memory_space<vmem>>, vector<16x96xf32>,
    } else {
    }
    %c0 = arith.constant 0 : index
    %c0_1 = arith.constant 0 : index
    %3 = vector.load %arg7[%c0, %c0_1] : memref<16x96xf32, #tpu.memory_space<vmem>>, vector<16x96xf32>
    %c0_2 = arith.constant 0 : index
    %c0_3 = arith.constant 0 : index
    %4 = vector.load %arg3[%c0_2, %c0_3] : memref<16x32xf32, #tpu.memory_space<vmem>>, vector<16x32xf32>
    %c0_4 = arith.constant 0 : index
    %c0_5 = arith.constant 0 : index
    %5 = vector.load %arg4[%c0_4, %c0_5] : memref<96x32xf32, #tpu.memory_space<vmem>>, vector<96x32xf32>
    %cst = arith.constant dense<0.000000e+00> : vector<16x96xf32>
    %6 = tpu.matmul %4, %5, %cst {dimension_numbers = #tpu.dot_dimension_numbers<[1], [1], [0], [0], [0, 0, 1, 0], [], []>} : vector<16x32xf32>, vector<96x32xf32>, vector<16x96xf32> -> vector<16x96xf32>
    %7 = arith.addf %3, %6 : vector<16x96xf32>
    %c0_6 = arith.constant 0 : index
    %c0_7 = arith.constant 0 : index
    %8 = vector.load %arg7[%c0_6, %c0_7] : memref<16x96xf32, #tpu.memory_space<vmem>>, vector<16x96xf32>
    tpu.vector_store %arg7[%c0_6, %c0_7], %7 {strides = array<i32>} : memref<16x96xf32, #tpu.memory_space<vmem>>, vector<16x96xf32>,
    %c0_i32_8 = arith.constant 0 : i32
    %9 = arith.cmpi eq, %arg2, %c0_i32_8 : i32
    %10 = arith.extui %9 : i1 to i32
    %c0_i32_9 = arith.constant 0 : i32
    %11 = arith.cmpi ne, %10, %c0_i32_9 : i32
    scf.if %11 {
      %c0_10 = arith.constant 0 : index
      %c0_11 = arith.constant 0 : index
      %12 = vector.load %arg7[%c0_10, %c0_11] : memref<16x96xf32, #tpu.memory_space<vmem>>, vector<16x96xf32>
      %c0_12 = arith.constant 0 : index
      %c0_13 = arith.constant 0 : index
      %13 = vector.load %arg5[%c0_12, %c0_13] : memref<1x96xf32, #tpu.memory_space<vmem>>, vector<1x96xf32>
      %14 = vector.broadcast %13 : vector<1x96xf32> to vector<16x96xf32>
      %15 = arith.addf %12, %14 : vector<16x96xf32>
      %c0_14 = arith.constant 0 : index
      %c0_15 = arith.constant 0 : index
      %16 = vector.load %arg6[%c0_14, %c0_15] : memref<16x96xf32, #tpu.memory_space<vmem>>, vector<16x96xf32>
      tpu.vector_store %arg6[%c0_14, %c0_15], %15 {strides = array<i32>} : memref<16x96xf32, #tpu.memory_space<vmem>>, vector<16x96xf32>,
    } else {
    }
    return
  }
  func.func @transform_0(%arg0: i32, %arg1: i32, %arg2: i32) -> (i32, i32) {
    %c0_i32 = arith.constant 0 : i32
    return %arg0, %arg2 : i32, i32
  }
  func.func @transform_1(%arg0: i32, %arg1: i32, %arg2: i32) -> (i32, i32) {
    %c0_i32 = arith.constant 0 : i32
    return %arg1, %arg2 : i32, i32
  }
  func.func @transform_2(%arg0: i32, %arg1: i32, %arg2: i32) -> (i32, i32) {
    %c0_i32 = arith.constant 0 : i32
    %c0_i32_0 = arith.constant 0 : i32
    return %c0_i32, %arg1 : i32, i32
  }
  func.func @transform_3(%arg0: i32, %arg1: i32, %arg2: i32) -> (i32, i32) {
    %c0_i32 = arith.constant 0 : i32
    return %arg0, %arg1 : i32, i32
  }
}

module attributes {stable_mosaic.version = 11 : i64} {
  func.func @_flash_attn_kernel(%arg0: i32, %arg1: i32, %arg2: i32, %arg3: i32, %arg4: memref<1x1x8xi32, #tpu.memory_space<vmem>>, %arg5: memref<1x1x8x8xf32, #tpu.memory_space<vmem>>, %arg6: memref<1x1x8x8xf32, #tpu.memory_space<vmem>>, %arg7: memref<1x1x8x8xf32, #tpu.memory_space<vmem>>, %arg8: memref<1x1x8x8xf32, #tpu.memory_space<vmem>>, %arg9: memref<1x1x8x8xf32, #tpu.memory_space<vmem>>, %arg10: memref<8x1xf32, #tpu.memory_space<vmem>>, %arg11: memref<8x1xf32, #tpu.memory_space<vmem>>, %arg12: memref<8x8xf32, #tpu.memory_space<vmem>>) attributes {dimension_semantics = [#tpu.dimension_semantics<parallel>, #tpu.dimension_semantics<parallel>, #tpu.dimension_semantics<parallel>, #tpu.dimension_semantics<arbitrary>], iteration_bounds = array<i64: 2, 4, 1, 1>, scalar_prefetch = 0 : i64, scratch_operands = 3 : i64, tpu.core_type = #tpu.core_type<tc>, window_params = [{transform_indices = @transform_0, window_bounds = array<i64: 1, 1, 8>}, {transform_indices = @transform_1, window_bounds = array<i64: 1, 1, 8, 8>}, {transform_indices = @transform_2, window_bounds = array<i64: 1, 1, 8, 8>}, {transform_indices = @transform_3, window_bounds = array<i64: 1, 1, 8, 8>}, {transform_indices = @transform_4, window_bounds = array<i64: 1, 1, 8, 8>}, {transform_indices = @transform_5, window_bounds = array<i64: 1, 1, 8, 8>}]} {
    %c0_i32 = arith.constant 0 : i32
    %0 = arith.cmpi eq, %arg3, %c0_i32 : i32
    %1 = arith.extui %0 : i1 to i32
    %c0_i32_0 = arith.constant 0 : i32
    %2 = arith.cmpi ne, %1, %c0_i32_0 : i32
    scf.if %2 {
      %cst_40 = arith.constant 0xFF800000 : f32
      %50 = vector.broadcast %cst_40 : f32 to vector<8x1xf32>
      %c0_41 = arith.constant 0 : index
      %c0_42 = arith.constant 0 : index
      %51 = vector.load %arg10[%c0_41, %c0_42] : memref<8x1xf32, #tpu.memory_space<vmem>>, vector<8x1xf32>
      tpu.vector_store %arg10[%c0_41, %c0_42], %50 {strides = array<i32>} : memref<8x1xf32, #tpu.memory_space<vmem>>, vector<8x1xf32>,
      %cst_43 = arith.constant 0.000000e+00 : f32
      %52 = vector.broadcast %cst_43 : f32 to vector<8x1xf32>
      %c0_44 = arith.constant 0 : index
      %c0_45 = arith.constant 0 : index
      %53 = vector.load %arg11[%c0_44, %c0_45] : memref<8x1xf32, #tpu.memory_space<vmem>>, vector<8x1xf32>
      tpu.vector_store %arg11[%c0_44, %c0_45], %52 {strides = array<i32>} : memref<8x1xf32, #tpu.memory_space<vmem>>, vector<8x1xf32>,
      %cst_46 = arith.constant 0.000000e+00 : f32
      %54 = vector.broadcast %cst_46 : f32 to vector<8x8xf32>
      %c0_47 = arith.constant 0 : index
      %c0_48 = arith.constant 0 : index
      %55 = vector.load %arg12[%c0_47, %c0_48] : memref<8x8xf32, #tpu.memory_space<vmem>>, vector<8x8xf32>
      tpu.vector_store %arg12[%c0_47, %c0_48], %54 {strides = array<i32>} : memref<8x8xf32, #tpu.memory_space<vmem>>, vector<8x8xf32>,
    } else {
    }
    %c0 = arith.constant 0 : index
    %c0_1 = arith.constant 0 : index
    %c0_2 = arith.constant 0 : index
    %c0_3 = arith.constant 0 : index
    %3 = vector.load %arg6[%c0, %c0_1, %c0_2, %c0_3] : memref<1x1x8x8xf32, #tpu.memory_space<vmem>>, vector<1x1x8x8xf32>
    %4 = vector.shape_cast %3 : vector<1x1x8x8xf32> to vector<8x8xf32>
    %c0_4 = arith.constant 0 : index
    %c0_5 = arith.constant 0 : index
    %c0_6 = arith.constant 0 : index
    %c0_7 = arith.constant 0 : index
    %5 = vector.load %arg7[%c0_4, %c0_5, %c0_6, %c0_7] : memref<1x1x8x8xf32, #tpu.memory_space<vmem>>, vector<1x1x8x8xf32>
    %6 = vector.shape_cast %5 : vector<1x1x8x8xf32> to vector<8x8xf32>
    %cst = arith.constant dense<0.000000e+00> : vector<8x8xf32>
    %7 = tpu.matmul %4, %6, %cst {dimension_numbers = #tpu.dot_dimension_numbers<[1], [1], [0], [0], [0, 0, 1, 0], [], []>} : vector<8x8xf32>, vector<8x8xf32>, vector<8x8xf32> -> vector<8x8xf32>
    %c0_8 = arith.constant 0 : index
    %c0_9 = arith.constant 0 : index
    %c0_10 = arith.constant 0 : index
    %c0_11 = arith.constant 0 : index
    %8 = vector.load %arg5[%c0_8, %c0_9, %c0_10, %c0_11] : memref<1x1x8x8xf32, #tpu.memory_space<vmem>>, vector<1x1x8x8xf32>
    %9 = vector.shape_cast %8 : vector<1x1x8x8xf32> to vector<8x8xf32>
    %10 = arith.addf %7, %9 : vector<8x8xf32>
    %c0_12 = arith.constant 0 : index
    %c0_13 = arith.constant 0 : index
    %c0_14 = arith.constant 0 : index
    %11 = vector.load %arg4[%c0_12, %c0_13, %c0_14] : memref<1x1x8xi32, #tpu.memory_space<vmem>>, vector<1x1x8xi32>
    %12 = vector.shape_cast %11 : vector<1x1x8xi32> to vector<1x8xi32>
    %c0_i32_15 = arith.constant 0 : i32
    %13 = vector.broadcast %c0_i32_15 : i32 to vector<1x8xi32>
    %14 = arith.cmpi ne, %12, %13 : vector<1x8xi32>
    %cst_16 = arith.constant 0xFF800000 : f32
    %15 = vector.shape_cast %14 : vector<1x8xi1> to vector<1x8xi1>
    %16 = vector.broadcast %15 : vector<1x8xi1> to vector<8x8xi1>
    %17 = vector.broadcast %cst_16 : f32 to vector<8x8xf32>
    %18 = arith.select %16, %17, %10 : vector<8x8xi1>, vector<8x8xf32>
    %c0_17 = arith.constant 0 : index
    %c0_18 = arith.constant 0 : index
    %19 = vector.load %arg10[%c0_17, %c0_18] : memref<8x1xf32, #tpu.memory_space<vmem>>, vector<8x1xf32>
    %cst_19 = arith.constant dense<0xFF800000> : vector<8xf32>
    %20 = vector.multi_reduction <maximumf>, %18, %cst_19 [1] : vector<8x8xf32> to vector<8xf32>
    %21 = vector.shape_cast %20 : vector<8xf32> to vector<8x1xf32>
    %22 = arith.maximumf %19, %21 : vector<8x1xf32>
    %cst_20 = arith.constant 0xFF800000 : f32
    %23 = vector.broadcast %cst_20 : f32 to vector<8x1xf32>
    %24 = arith.cmpf oeq, %22, %23 : vector<8x1xf32>
    %cst_21 = arith.constant 0.000000e+00 : f32
    %25 = vector.broadcast %cst_21 : f32 to vector<8x1xf32>
    %26 = arith.select %24, %25, %22 : vector<8x1xi1>, vector<8x1xf32>
    %27 = arith.subf %19, %26 : vector<8x1xf32>
    %28 = math.exp %27 : vector<8x1xf32>
    %29 = vector.broadcast %26 : vector<8x1xf32> to vector<8x8xf32>
    %30 = arith.subf %18, %29 : vector<8x8xf32>
    %31 = math.exp %30 : vector<8x8xf32>
    %c0_22 = arith.constant 0 : index
    %c0_23 = arith.constant 0 : index
    %32 = vector.load %arg11[%c0_22, %c0_23] : memref<8x1xf32, #tpu.memory_space<vmem>>, vector<8x1xf32>
    %33 = arith.mulf %28, %32 : vector<8x1xf32>
    %cst_24 = arith.constant dense<0.000000e+00> : vector<8xf32>
    %34 = vector.multi_reduction <add>, %31, %cst_24 [1] : vector<8x8xf32> to vector<8xf32>
    %35 = vector.shape_cast %34 : vector<8xf32> to vector<8x1xf32>
    %36 = arith.addf %33, %35 : vector<8x1xf32>
    %c0_25 = arith.constant 0 : index
    %c0_26 = arith.constant 0 : index
    %37 = vector.load %arg11[%c0_25, %c0_26] : memref<8x1xf32, #tpu.memory_space<vmem>>, vector<8x1xf32>
    tpu.vector_store %arg11[%c0_25, %c0_26], %36 {strides = array<i32>} : memref<8x1xf32, #tpu.memory_space<vmem>>, vector<8x1xf32>,
    %c0_27 = arith.constant 0 : index
    %c0_28 = arith.constant 0 : index
    %38 = vector.load %arg12[%c0_27, %c0_28] : memref<8x8xf32, #tpu.memory_space<vmem>>, vector<8x8xf32>
    %39 = vector.broadcast %28 : vector<8x1xf32> to vector<8x8xf32>
    %40 = arith.mulf %39, %38 : vector<8x8xf32>
    %c0_29 = arith.constant 0 : index
    %c0_30 = arith.constant 0 : index
    %c0_31 = arith.constant 0 : index
    %c0_32 = arith.constant 0 : index
    %41 = vector.load %arg8[%c0_29, %c0_30, %c0_31, %c0_32] : memref<1x1x8x8xf32, #tpu.memory_space<vmem>>, vector<1x1x8x8xf32>
    %42 = vector.shape_cast %41 : vector<1x1x8x8xf32> to vector<8x8xf32>
    %cst_33 = arith.constant dense<0.000000e+00> : vector<8x8xf32>
    %43 = tpu.matmul %31, %42, %cst_33 {dimension_numbers = #tpu.dot_dimension_numbers<[1], [0], [0], [1], [0, 0, 1, 1], [], []>} : vector<8x8xf32>, vector<8x8xf32>, vector<8x8xf32> -> vector<8x8xf32>
    %44 = arith.addf %40, %43 : vector<8x8xf32>
    %c0_34 = arith.constant 0 : index
    %c0_35 = arith.constant 0 : index
    %45 = vector.load %arg12[%c0_34, %c0_35] : memref<8x8xf32, #tpu.memory_space<vmem>>, vector<8x8xf32>
    tpu.vector_store %arg12[%c0_34, %c0_35], %44 {strides = array<i32>} : memref<8x8xf32, #tpu.memory_space<vmem>>, vector<8x8xf32>,
    %c0_36 = arith.constant 0 : index
    %c0_37 = arith.constant 0 : index
    %46 = vector.load %arg10[%c0_36, %c0_37] : memref<8x1xf32, #tpu.memory_space<vmem>>, vector<8x1xf32>
    tpu.vector_store %arg10[%c0_36, %c0_37], %22 {strides = array<i32>} : memref<8x1xf32, #tpu.memory_space<vmem>>, vector<8x1xf32>,
    %c0_i32_38 = arith.constant 0 : i32
    %47 = arith.cmpi eq, %arg3, %c0_i32_38 : i32
    %48 = arith.extui %47 : i1 to i32
    %c0_i32_39 = arith.constant 0 : i32
    %49 = arith.cmpi ne, %48, %c0_i32_39 : i32
    scf.if %49 {
      %c0_40 = arith.constant 0 : index
      %c0_41 = arith.constant 0 : index
      %50 = vector.load %arg11[%c0_40, %c0_41] : memref<8x1xf32, #tpu.memory_space<vmem>>, vector<8x1xf32>
      %51 = tpu.reciprocal %50 {approx = true} : vector<8x1xf32> -> vector<8x1xf32>
      %c0_42 = arith.constant 0 : index
      %c0_43 = arith.constant 0 : index
      %52 = vector.load %arg12[%c0_42, %c0_43] : memref<8x8xf32, #tpu.memory_space<vmem>>, vector<8x8xf32>
      %53 = vector.broadcast %51 : vector<8x1xf32> to vector<8x8xf32>
      %54 = arith.mulf %52, %53 : vector<8x8xf32>
      %c0_44 = arith.constant 0 : index
      %c0_45 = arith.constant 0 : index
      %c0_46 = arith.constant 0 : index
      %c0_47 = arith.constant 0 : index
      %55 = vector.load %arg9[%c0_44, %c0_45, %c0_46, %c0_47] : memref<1x1x8x8xf32, #tpu.memory_space<vmem>>, vector<1x1x8x8xf32>
      %56 = vector.shape_cast %55 : vector<1x1x8x8xf32> to vector<8x8xf32>
      %57 = vector.shape_cast %54 : vector<8x8xf32> to vector<1x1x8x8xf32>
      tpu.vector_store %arg9[%c0_44, %c0_45, %c0_46, %c0_47], %57 {strides = array<i32>} : memref<1x1x8x8xf32, #tpu.memory_space<vmem>>, vector<1x1x8x8xf32>,
    } else {
    }
    return
  }
  func.func @transform_0(%arg0: i32, %arg1: i32, %arg2: i32, %arg3: i32) -> (i32, i32, i32) {
    %c0_i32 = arith.constant 0 : i32
    %c0_i32_0 = arith.constant 0 : i32
    return %arg0, %c0_i32, %arg3 : i32, i32, i32
  }
  func.func @transform_1(%arg0: i32, %arg1: i32, %arg2: i32, %arg3: i32) -> (i32, i32, i32, i32) {
    %c0_i32 = arith.constant 0 : i32
    return %arg0, %arg1, %arg2, %arg3 : i32, i32, i32, i32
  }
  func.func @transform_2(%arg0: i32, %arg1: i32, %arg2: i32, %arg3: i32) -> (i32, i32, i32, i32) {
    %c0_i32 = arith.constant 0 : i32
    %c0_i32_0 = arith.constant 0 : i32
    return %arg0, %arg1, %arg2, %c0_i32 : i32, i32, i32, i32
  }
  func.func @transform_3(%arg0: i32, %arg1: i32, %arg2: i32, %arg3: i32) -> (i32, i32, i32, i32) {
    %c0_i32 = arith.constant 0 : i32
    %c0_i32_0 = arith.constant 0 : i32
    return %arg0, %arg1, %arg3, %c0_i32 : i32, i32, i32, i32
  }
  func.func @transform_4(%arg0: i32, %arg1: i32, %arg2: i32, %arg3: i32) -> (i32, i32, i32, i32) {
    %c0_i32 = arith.constant 0 : i32
    %c0_i32_0 = arith.constant 0 : i32
    return %arg0, %arg1, %arg3, %c0_i32 : i32, i32, i32, i32
  }
  func.func @transform_5(%arg0: i32, %arg1: i32, %arg2: i32, %arg3: i32) -> (i32, i32, i32, i32) {
    %c0_i32 = arith.constant 0 : i32
    %c0_i32_0 = arith.constant 0 : i32
    return %arg0, %arg1, %arg2, %c0_i32 : i32, i32, i32, i32
  }
}

module attributes {stable_mosaic.version = 11 : i64} {
  func.func @_out_proj_ln_kernel(%arg0: i32, %arg1: memref<16x32xf32, #tpu.memory_space<vmem>>, %arg2: memref<32x32xf32, #tpu.memory_space<vmem>>, %arg3: memref<1x32xf32, #tpu.memory_space<vmem>>, %arg4: memref<16x32xf32, #tpu.memory_space<vmem>>, %arg5: memref<1x32xf32, #tpu.memory_space<vmem>>, %arg6: memref<1x32xf32, #tpu.memory_space<vmem>>, %arg7: memref<16x32xf32, #tpu.memory_space<vmem>>) attributes {dimension_semantics = [#tpu.dimension_semantics<parallel>], iteration_bounds = array<i64: 1>, scalar_prefetch = 0 : i64, scratch_operands = 0 : i64, tpu.core_type = #tpu.core_type<tc>, window_params = [{transform_indices = @transform_0, window_bounds = array<i64: 16, 32>}, {pipeline_mode = #tpu.pipeline_mode<synchronous>, transform_indices = @transform_1, window_bounds = array<i64: 32, 32>}, {pipeline_mode = #tpu.pipeline_mode<synchronous>, transform_indices = @transform_2, window_bounds = array<i64: 1, 32>}, {transform_indices = @transform_3, window_bounds = array<i64: 16, 32>}, {pipeline_mode = #tpu.pipeline_mode<synchronous>, transform_indices = @transform_4, window_bounds = array<i64: 1, 32>}, {pipeline_mode = #tpu.pipeline_mode<synchronous>, transform_indices = @transform_5, window_bounds = array<i64: 1, 32>}, {transform_indices = @transform_6, window_bounds = array<i64: 16, 32>}]} {
    %c0 = arith.constant 0 : index
    %c0_0 = arith.constant 0 : index
    %0 = vector.load %arg1[%c0, %c0_0] : memref<16x32xf32, #tpu.memory_space<vmem>>, vector<16x32xf32>
    %c0_1 = arith.constant 0 : index
    %c0_2 = arith.constant 0 : index
    %1 = vector.load %arg2[%c0_1, %c0_2] : memref<32x32xf32, #tpu.memory_space<vmem>>, vector<32x32xf32>
    %cst = arith.constant dense<0.000000e+00> : vector<16x32xf32>
    %2 = tpu.matmul %0, %1, %cst {dimension_numbers = #tpu.dot_dimension_numbers<[1], [1], [0], [0], [0, 0, 1, 0], [], []>} : vector<16x32xf32>, vector<32x32xf32>, vector<16x32xf32> -> vector<16x32xf32>
    %c0_3 = arith.constant 0 : index
    %c0_4 = arith.constant 0 : index
    %3 = vector.load %arg3[%c0_3, %c0_4] : memref<1x32xf32, #tpu.memory_space<vmem>>, vector<1x32xf32>
    %4 = vector.broadcast %3 : vector<1x32xf32> to vector<16x32xf32>
    %5 = arith.addf %2, %4 : vector<16x32xf32>
    %6 = arith.cmpf one, %5, %5 : vector<16x32xf32>
    %cst_5 = arith.constant 0.000000e+00 : f32
    %7 = vector.broadcast %cst_5 : f32 to vector<16x32xf32>
    %8 = arith.select %6, %7, %5 : vector<16x32xi1>, vector<16x32xf32>
    %c0_6 = arith.constant 0 : index
    %c0_7 = arith.constant 0 : index
    %9 = vector.load %arg4[%c0_6, %c0_7] : memref<16x32xf32, #tpu.memory_space<vmem>>, vector<16x32xf32>
    %10 = arith.addf %9, %8 : vector<16x32xf32>
    %cst_8 = arith.constant dense<0.000000e+00> : vector<16xf32>
    %11 = vector.multi_reduction <add>, %10, %cst_8 [1] : vector<16x32xf32> to vector<16xf32>
    %12 = vector.shape_cast %11 : vector<16xf32> to vector<16x1xf32>
    %cst_9 = arith.constant 3.200000e+01 : f32
    %13 = vector.broadcast %cst_9 : f32 to vector<16x1xf32>
    %14 = arith.divf %12, %13 : vector<16x1xf32>
    %15 = vector.broadcast %14 : vector<16x1xf32> to vector<16x32xf32>
    %16 = arith.subf %10, %15 : vector<16x32xf32>
    %17 = arith.mulf %16, %16 : vector<16x32xf32>
    %cst_10 = arith.constant dense<0.000000e+00> : vector<16xf32>
    %18 = vector.multi_reduction <add>, %17, %cst_10 [1] : vector<16x32xf32> to vector<16xf32>
    %19 = vector.shape_cast %18 : vector<16xf32> to vector<16x1xf32>
    %cst_11 = arith.constant 3.200000e+01 : f32
    %20 = vector.broadcast %cst_11 : f32 to vector<16x1xf32>
    %21 = arith.divf %19, %20 : vector<16x1xf32>
    %22 = vector.broadcast %14 : vector<16x1xf32> to vector<16x32xf32>
    %23 = arith.subf %10, %22 : vector<16x32xf32>
    %cst_12 = arith.constant 9.99999974E-6 : f32
    %24 = vector.broadcast %cst_12 : f32 to vector<16x1xf32>
    %25 = arith.addf %21, %24 : vector<16x1xf32>
    %26 = math.rsqrt %25 : vector<16x1xf32>
    %27 = vector.broadcast %26 : vector<16x1xf32> to vector<16x32xf32>
    %28 = arith.mulf %23, %27 : vector<16x32xf32>
    %c0_13 = arith.constant 0 : index
    %c0_14 = arith.constant 0 : index
    %29 = vector.load %arg5[%c0_13, %c0_14] : memref<1x32xf32, #tpu.memory_space<vmem>>, vector<1x32xf32>
    %30 = vector.broadcast %29 : vector<1x32xf32> to vector<16x32xf32>
    %31 = arith.mulf %28, %30 : vector<16x32xf32>
    %c0_15 = arith.constant 0 : index
    %c0_16 = arith.constant 0 : index
    %32 = vector.load %arg6[%c0_15, %c0_16] : memref<1x32xf32, #tpu.memory_space<vmem>>, vector<1x32xf32>
    %33 = vector.broadcast %32 : vector<1x32xf32> to vector<16x32xf32>
    %34 = arith.addf %31, %33 : vector<16x32xf32>
    %c0_17 = arith.constant 0 : index
    %c0_18 = arith.constant 0 : index
    %35 = vector.load %arg7[%c0_17, %c0_18] : memref<16x32xf32, #tpu.memory_space<vmem>>, vector<16x32xf32>
    tpu.vector_store %arg7[%c0_17, %c0_18], %34 {strides = array<i32>} : memref<16x32xf32, #tpu.memory_space<vmem>>, vector<16x32xf32>,
    return
  }
  func.func @transform_0(%arg0: i32) -> (i32, i32) {
    %c0_i32 = arith.constant 0 : i32
    %c0_i32_0 = arith.constant 0 : i32
    return %arg0, %c0_i32 : i32, i32
  }
  func.func @transform_1(%arg0: i32) -> (i32, i32) {
    %c0_i32 = arith.constant 0 : i32
    %c0_i32_0 = arith.constant 0 : i32
    %c0_i32_1 = arith.constant 0 : i32
    return %c0_i32, %c0_i32_0 : i32, i32
  }
  func.func @transform_2(%arg0: i32) -> (i32, i32) {
    %c0_i32 = arith.constant 0 : i32
    %c0_i32_0 = arith.constant 0 : i32
    %c0_i32_1 = arith.constant 0 : i32
    return %c0_i32, %c0_i32_0 : i32, i32
  }
  func.func @transform_3(%arg0: i32) -> (i32, i32) {
    %c0_i32 = arith.constant 0 : i32
    %c0_i32_0 = arith.constant 0 : i32
    return %arg0, %c0_i32 : i32, i32
  }
  func.func @transform_4(%arg0: i32) -> (i32, i32) {
    %c0_i32 = arith.constant 0 : i32
    %c0_i32_0 = arith.constant 0 : i32
    %c0_i32_1 = arith.constant 0 : i32
    return %c0_i32, %c0_i32_0 : i32, i32
  }
  func.func @transform_5(%arg0: i32) -> (i32, i32) {
    %c0_i32 = arith.constant 0 : i32
    %c0_i32_0 = arith.constant 0 : i32
    %c0_i32_1 = arith.constant 0 : i32
    return %c0_i32, %c0_i32_0 : i32, i32
  }
  func.func @transform_6(%arg0: i32) -> (i32, i32) {
    %c0_i32 = arith.constant 0 : i32
    %c0_i32_0 = arith.constant 0 : i32
    return %arg0, %c0_i32 : i32, i32
  }
}

</mosaic_0001>

<llo_original>
// kernel: cocolm_attention.3
$region0: #{cocolm_attention.3}
  #allocation0 [shape = 'u32[]', space=smem, size = 0x4, offset = 0x4, fixed_abs, tag = 'smem constant byte address 0x4 - core index']
  #allocation1 [shape = 'u32[144,128]{1,0:T(1,128)}', space=vmem, size = 0x12000, scoped, tag = 'internal scratch']
  #allocation2 [shape = 'f32[16,96]{1,0:T(8,128)}', space=vmem, size = 0x2000, scoped, tag = 'scratch operand']
  %s0 = inlined_call_operand.vmem [shape: f32[16,32], index: 0, kind: input, shape index: {}]
  %s1 = inlined_call_operand.vmem [shape: f32[96,32], index: 1, kind: input, shape index: {}]
  %s2 = inlined_call_operand.vmem [shape: f32[1,96], index: 2, kind: input, shape index: {}]
  %s3 = inlined_call_operand.vmem [shape: f32[16,96], index: 3, kind: output, shape index: {}]
  %s4 = sld [smem:[#allocation0]]
  $region30: #{cocolm_attention.3} parent=0
    _
  %s6 = ssub.s32 1, %s4
  %s7 = scalar_select 0, %s6, %s4
  // Predicated region
  $region2: #{cocolm_attention.3} parent=0 // pred_check
    _
  $region3: #{cocolm_attention.3} parent=0 // pred_check_branch
    %9 = sbr.rel (0) target = $region5
  $region4: #{cocolm_attention.3} parent=0 // pred_region
    _
  $region5: #{cocolm_attention.3} parent=0 // pred_fallthru
    _
  // Predicated region
  $region6: #{cocolm_attention.3} parent=0 // pred_check
    _
  $region7: #{cocolm_attention.3} parent=0 // pred_check_branch
    %11 = sbr.rel (0) target = $region9
  $region8: #{cocolm_attention.3} parent=0 // pred_region
    _
  $region9: #{cocolm_attention.3} parent=0 // pred_fallthru
    _
  // Predicated region
  $region10: #{cocolm_attention.3} parent=0 // pred_check
    _
  $region11: #{cocolm_attention.3} parent=0 // pred_check_branch
    %13 = sbr.rel (0) target = $region13
  $region12: #{cocolm_attention.3} parent=0 // pred_region
    _
  $region13: #{cocolm_attention.3} parent=0 // pred_fallthru
    _
  %p14 = scmp.eq.s32.totalorder 0, 0
  // Predicated region
  $region14: #{cocolm_attention.3} parent=0 // pred_check
    %p15 = pneg %p14
  $region15: #{cocolm_attention.3} parent=0 // pred_check_branch
    %17 = sbr.rel (%p15) target = $region17
  $region16: #{cocolm_attention.3} parent=0 // pred_region
    %vm18 = vcmask 785408
    %19 = vst.msk [vmem:[#allocation2] sm:$0xff] %vm18, 0.0
    %20 = vst.msk [vmem:[#allocation2 + $0x8] sm:$0xff] %vm18, 0.0
  $region17: #{cocolm_attention.3} parent=0 // pred_fallthru
    _
  %v21 = vld [vmem:[#allocation2] sm:$0xff]
  %v22 = vld [vmem:[#allocation2 + $0x8] sm:$0xff]
  %v23 = vld [vmem:[%s0] sm:$0xff]
  %v24 = vld [vmem:[%s0 + $0x8] sm:$0xff]
  %v25 = vld [vmem:[%s1] sm:$0xff]
  %v26 = vld [vmem:[%s1 + $0x8] sm:$0xff]
  %v27 = vld [vmem:[%s1 + $0x10] sm:$0xff]
  %v28 = vld [vmem:[%s1 + $0x18] sm:$0xff]
  %v29 = vld [vmem:[%s1 + $0x20] sm:$0xff]
  %v30 = vld [vmem:[%s1 + $0x28] sm:$0xff]
  %v31 = vld [vmem:[%s1 + $0x30] sm:$0xff]
  %v32 = vld [vmem:[%s1 + $0x38] sm:$0xff]
  %v33 = vld [vmem:[%s1 + $0x40] sm:$0xff]
  %v34 = vld [vmem:[%s1 + $0x48] sm:$0xff]
  %v35 = vld [vmem:[%s1 + $0x50] sm:$0xff]
  %v36 = vld [vmem:[%s1 + $0x58] sm:$0xff]
  %vm37 = vcmask 261120
  %v39 = vsel %vm37, %v23, 0
  %v42 = vsel %vm37, %v24, 0
  %v45 = vsel %vm37, %v25, 0
  %v48 = vsel %vm37, %v26, 0
  %v51 = vsel %vm37, %v27, 0
  %v54 = vsel %vm37, %v28, 0
  %v57 = vsel %vm37, %v29, 0
  %v60 = vsel %vm37, %v30, 0
  %v63 = vsel %vm37, %v31, 0
  %v66 = vsel %vm37, %v32, 0
  %v69 = vsel %vm37, %v33, 0
  %v72 = vsel %vm37, %v34, 0
  %v75 = vsel %vm37, %v35, 0
  %v78 = vsel %vm37, %v36, 0
  %80 = vmatprep.subr.mxu0 0.0
  %81 = vmatpush1.xpose.msra.mxu0 %v45
  %82 = vmatprep.subr.mxu0 0.0
  %83 = vmatpush1.xpose.msra.mxu0 %v48
  %84 = vmatprep.subr.mxu0 0.0
  %85 = vmatpush1.xpose.msra.mxu0 %v51
  %86 = vmatprep.subr.mxu0 0.0
  %87 = vmatpush1.xpose.msra.mxu0 %v54
  %88 = vmatprep.subr.mxu0 0.0
  %89 = vmatpush1.xpose.msra.mxu0 %v57
  %90 = vmatprep.subr.mxu0 0.0
  %91 = vmatpush1.xpose.msra.mxu0 %v60
  %92 = vmatprep.subr.mxu0 0.0
  %93 = vmatpush1.xpose.msra.mxu0 %v63
  %94 = vmatprep.subr.mxu0 0.0
  %95 = vmatpush1.xpose.msra.mxu0 %v66
  %96 = vmatprep.subr.mxu0 0.0
  %97 = vmatpush1.xpose.msra.mxu0 %v69
  %98 = vmatprep.subr.mxu0 0.0
  %99 = vmatpush1.xpose.msra.mxu0 %v72
  %100 = vmatprep.subr.mxu0 0.0
  %101 = vmatpush1.xpose.msra.mxu0 %v75
  %102 = vmatprep.subr.mxu0 0.0
  %103 = vmatpush1.xpose.msra.mxu0 %v78
  %104 = vmatprep.subr.mxu0 0.0
  %105 = vmatpush1.xpose.msra.mxu0 0.0
  %106 = vmatprep.subr.mxu0 0.0
  %107 = vmatpush1.xpose.msra.mxu0 0.0
  %108 = vmatprep.subr.mxu0 0.0
  %109 = vmatpush1.xpose.msra.mxu0 0.0
  %110 = vmatprep.subr.mxu0 0.0
  %111 = vmatpush1.xpose.msra.mxu0 0.0
  %112 = vmatprep.subr.mxu0 0.0
  %113 = vmatpush1.xpose.msra.mxu0 0.0
  %114 = vmatprep.subr.mxu0 0.0
  %115 = vmatpush1.xpose.msra.mxu0 0.0
  %116 = vmatprep.subr.mxu0 0.0
  %117 = vmatpush1.xpose.msra.mxu0 0.0
  %118 = vmatprep.subr.mxu0 0.0
  %119 = vmatpush1.xpose.msra.mxu0 0.0
  %120 = vmatprep.subr.mxu0 0.0
  %121 = vmatpush1.xpose.msra.mxu0 0.0
  %122 = vmatprep.subr.mxu0 0.0
  %123 = vmatpush1.xpose.msra.mxu0 0.0
  %124 = vmatprep.subr.mxu0 0.0
  %125 = vmatpush1.xpose.msra.mxu0 0.0
  %126 = vmatprep.subr.mxu0 0.0
  %127 = vmatpush1.xpose.msra.mxu0 0.0
  %128 = vmatprep.subr.mxu0 0.0
  %129 = vmatpush1.xpose.msra.mxu0 0.0
  %130 = vmatprep.subr.mxu0 0.0
  %131 = vmatpush1.xpose.msra.mxu0 0.0
  %132 = vmatprep.subr.mxu0 0.0
  %133 = vmatpush1.xpose.msra.mxu0 0.0
  %134 = vmatprep.subr.mxu0 0.0
  %135 = vmatpush1.xpose.msra.mxu0 0.0
  %136 = vmatprep.subr.mxu0 0.0
  %137 = vmatpush1.xpose.msra.mxu0 0.0
  %138 = vmatprep.subr.mxu0 0.0
  %139 = vmatpush1.xpose.msra.mxu0 0.0
  %140 = vmatprep.subr.mxu0 0.0
  %141 = vmatpush1.xpose.msra.mxu0 0.0
  %142 = vmatprep.subr.mxu0 0.0
  %143 = vmatpush1.xpose.msra.mxu0 0.0
  %144 = vmatprep.mubr.f32.mxu0 0.0
  %145 = vmatmul.mubr.f32.gmra.mrb[0].mxu0 %v39
  %v146 = vpop.f32.mrb[0].mxu0
  %v147 = vadd.f32 0.0, %v146
  %v148 = vpop.f32.mrb[0].mxu0
  %149 = vmatprep.mubr.f32.mxu0 0.0
  %150 = vmatmul.mubr.f32.gmra.mrb[0].mxu0 %v42
  %v151 = vpop.f32.mrb[0].mxu0
  %v152 = vadd.f32 0.0, %v151
  %v153 = vpop.f32.mrb[0].mxu0
  %154 = vdwg.mxu0
  %v155 = vadd.f32 %v21, %v147
  %v156 = vadd.f32 %v22, %v152
  %vm157 = vcmask 785408
  %158 = vst.msk [vmem:[#allocation2] sm:$0xff] %vm157, %v155
  %159 = vst.msk [vmem:[#allocation2 + $0x8] sm:$0xff] %vm157, %v156
  // Predicated region
  $region18: #{cocolm_attention.3} parent=0 // pred_check
    %p160 = pneg %p14
  $region19: #{cocolm_attention.3} parent=0 // pred_check_branch
    %162 = sbr.rel (%p160) target = $region21
  $region20: #{cocolm_attention.3} parent=0 // pred_region
    %v163 = vld [vmem:[#allocation2] sm:$0xff]
    %v164 = vld [vmem:[#allocation2 + $0x8] sm:$0xff]
    %v165 = vld [vmem:[%s2] sm:$0x1]
    %v167 = vlaneseq
    %v168 = vshrl.u32 %v167, 7
    %v169 = vsub.s32 0, %v168
    %v170 = vrot.slane %v165, %v169
    %v172 = vadd.f32 %v163, %v170
    %v173 = vadd.f32 %v164, %v170
    %174 = vst.msk [vmem:[%s3] sm:$0xff] %vm157, %v172
    %175 = vst.msk [vmem:[%s3 + $0x8] sm:$0xff] %vm157, %v173
  $region21: #{cocolm_attention.3} parent=0 // pred_fallthru
    _
  // Predicated region
  $region22: #{cocolm_attention.3} parent=0 // pred_check
    _
  $region23: #{cocolm_attention.3} parent=0 // pred_check_branch
    %177 = sbr.rel (0) target = $region25
  $region24: #{cocolm_attention.3} parent=0 // pred_region
    _
  $region25: #{cocolm_attention.3} parent=0 // pred_fallthru
    _
  // Predicated region
  $region26: #{cocolm_attention.3} parent=0 // pred_check
    _
  $region27: #{cocolm_attention.3} parent=0 // pred_check_branch
    %179 = sbr.rel (0) target = $region29
  $region28: #{cocolm_attention.3} parent=0 // pred_region
    _
  $region29: #{cocolm_attention.3} parent=0 // pred_fallthru
    _

// kernel: cocolm_attention.4
$region0: #{cocolm_attention.4}
  #allocation0 [shape = 'u32[]', space=smem, size = 0x4, offset = 0x4, fixed_abs, tag = 'smem constant byte address 0x4 - core index']
  #allocation1 [shape = 'u32[144,128]{1,0:T(1,128)}', space=vmem, size = 0x12000, scoped, tag = 'internal scratch']
  #allocation2 [shape = 'f32[8,1]{1,0:T(8,128)}', space=vmem, size = 0x1000, scoped, tag = 'scratch operand']
  #allocation3 [shape = 'f32[8,1]{1,0:T(8,128)}', space=vmem, size = 0x1000, scoped, tag = 'scratch operand']
  #allocation4 [shape = 'f32[8,8]{1,0:T(8,128)}', space=vmem, size = 0x1000, scoped, tag = 'scratch operand']
  %s0 = inlined_call_operand.vmem [shape: s32[2,1,8], index: 0, kind: input, shape index: {}]
  %s1 = inlined_call_operand.vmem [shape: f32[2,4,8,8], index: 1, kind: input, shape index: {}]
  %s2 = inlined_call_operand.vmem [shape: f32[2,4,8,8], index: 2, kind: input, shape index: {}]
  %s3 = inlined_call_operand.vmem [shape: f32[2,4,8,8], index: 3, kind: input, shape index: {}]
  %s4 = inlined_call_operand.vmem [shape: f32[2,4,8,8], index: 4, kind: input, shape index: {}]
  %s5 = inlined_call_operand.vmem [shape: f32[2,4,8,8], index: 5, kind: output, shape index: {}]
  %s6 = sld [smem:[#allocation0]]
  $region61: #{cocolm_attention.4} parent=0
    _
  %s8 = ssub.s32 1, %s6
  %s9 = scalar_select 0, %s8, %s6
  loop: start=0, step=1, limit=10
  $region2: #{cocolm_attention.4} parent=0 // loop_pre_header
    _
  $region3: #{cocolm_attention.4} parent=0 // loop_header
    %s11 = sphi 0, %s15
    %p12 = scmp.ge.s32.totalorder %s11, 10
    %s18 = sphi 0, %s44
    %s19 = sphi 0, %s40
    %s20 = sphi 0, %s36
    %s21 = sphi 0, %s32
    %s22 = sphi 0, %s18
    %s23 = sphi 0, %s19
    %s24 = sphi 0, %s20
    %s25 = sphi 0, %s21
    %s26 = sphi 0, %s22
    %s27 = sphi 0, %s23
    %s28 = sphi 0, %s24
    %s29 = sphi 0, %s25
    %s49 = sphi 0, %s51
    %s52 = sphi 0, %s49
    %s53 = sphi 0, %s52
    %s69 = sphi 0, %s53
    %s81 = sphi 0, %s83
    %s84 = sphi 0, %s81
    %s85 = sphi 0, %s84
    %s101 = sphi 0, %s85
    %s111 = sphi 0, %s113
    %s114 = sphi 0, %s111
    %s115 = sphi 0, %s114
    %s131 = sphi 0, %s115
    %s141 = sphi 0, %s143
    %s144 = sphi 0, %s141
    %s145 = sphi 0, %s144
    %s161 = sphi 0, %s145
    %s171 = sphi 0, %s173
    %s174 = sphi 0, %s171
    %s175 = sphi 0, %s174
    %s191 = sphi 0, %s175
    %s201 = sphi 0, %s203
    %s204 = sphi 0, %s201
    %s205 = sphi 0, %s204
    %s221 = sphi 0, %s205
  $region4: #{cocolm_attention.4} parent=0 // loop_header_branch
    %14 = sbr.rel (%p12) target = $region8
  $region5: #{cocolm_attention.4} parent=0 // loop_body
    %s16 = ssub.s32 %s11, 1
    %s17 = ssub.s32 %s11, 2
    %s30 = sadd.s32 1, %s21
    %p31 = scmp.ge.s32.totalorder %s30, 1
    %s32 = scalar_select %p31, 0, %s30
    %s33 = sadd.s32 1, %s20
    %s34 = scalar_select %p31, %s33, %s20
    %p35 = scmp.ge.s32.totalorder %s34, 1
    %s36 = scalar_select %p35, 0, %s34
    %s37 = sadd.s32 1, %s19
    %s38 = scalar_select %p35, %s37, %s19
    %p39 = scmp.ge.s32.totalorder %s38, 4
    %s40 = scalar_select %p39, 0, %s38
    %s41 = sadd.s32 1, %s18
    %s42 = scalar_select %p39, %s41, %s18
    %p43 = scmp.ge.s32.totalorder %s42, 2
    %s44 = scalar_select %p43, 0, %s42
    %s45 = ssub.s32 %s18, %s44
    %s46 = ssub.s32 %s21, %s32
    %s47 = sor.u32 %s45, %s46
    %p48 = scmp.eq.s32.totalorder %s47, 0
    %s50 = sadd.s32 %s49, 1
    %s51 = scalar_select %p48, %s49, %s50
    %p54 = pneg %p48
    %p55 = scmp.eq.s32.totalorder %s11, 7
    %p56 = por %p54, %p55
    %p57 = scmp.ne.s32.totalorder %s49, %s52
    %p58 = scmp.eq.s32.totalorder %s11, 0
    %p59 = por %p57, %p58
    %p60 = scmp.ne.s32.totalorder %s49, %s52
    %p61 = scmp.eq.s32.totalorder %s16, 7
    %p62 = por %p60, %p61
    %p63 = scmp.ne.s32.totalorder %s52, %s53
    %p64 = scmp.eq.s32.totalorder %s16, 0
    %p65 = por %p63, %p64
    %p66 = scmp.ne.s32.totalorder %s52, %s53
    %p67 = scmp.eq.s32.totalorder %s17, 7
    %p68 = por %p66, %p67
    %p70 = scmp.ne.s32.totalorder %s53, %s69
    %p71 = scmp.eq.s32.totalorder %s17, 0
    %p72 = por %p70, %p71
    %s73 = ssub.s32 %s18, %s44
    %s74 = ssub.s32 %s19, %s40
    %s75 = sor.u32 %s73, %s74
    %s76 = ssub.s32 %s20, %s36
    %s77 = sor.u32 %s75, %s76
    %s78 = ssub.s32 %s21, %s32
    %s79 = sor.u32 %s77, %s78
    %p80 = scmp.eq.s32.totalorder %s79, 0
    %s82 = sadd.s32 %s81, 1
    %s83 = scalar_select %p80, %s81, %s82
    %p86 = pneg %p80
    %p87 = scmp.eq.s32.totalorder %s11, 7
    %p88 = por %p86, %p87
    %p89 = scmp.ne.s32.totalorder %s81, %s84
    %p90 = scmp.eq.s32.totalorder %s11, 0
    %p91 = por %p89, %p90
    %p92 = scmp.ne.s32.totalorder %s81, %s84
    %p93 = scmp.eq.s32.totalorder %s16, 7
    %p94 = por %p92, %p93
    %p95 = scmp.ne.s32.totalorder %s84, %s85
    %p96 = scmp.eq.s32.totalorder %s16, 0
    %p97 = por %p95, %p96
    %p98 = scmp.ne.s32.totalorder %s84, %s85
    %p99 = scmp.eq.s32.totalorder %s17, 7
    %p100 = por %p98, %p99
    %p102 = scmp.ne.s32.totalorder %s85, %s101
    %p103 = scmp.eq.s32.totalorder %s17, 0
    %p104 = por %p102, %p103
    %s105 = ssub.s32 %s18, %s44
    %s106 = ssub.s32 %s19, %s40
    %s107 = sor.u32 %s105, %s106
    %s108 = ssub.s32 %s20, %s36
    %s109 = sor.u32 %s107, %s108
    %p110 = scmp.eq.s32.totalorder %s109, 0
    %s112 = sadd.s32 %s111, 1
    %s113 = scalar_select %p110, %s111, %s112
    %p116 = pneg %p110
    %p117 = scmp.eq.s32.totalorder %s11, 7
    %p118 = por %p116, %p117
    %p119 = scmp.ne.s32.totalorder %s111, %s114
    %p120 = scmp.eq.s32.totalorder %s11, 0
    %p121 = por %p119, %p120
    %p122 = scmp.ne.s32.totalorder %s111, %s114
    %p123 = scmp.eq.s32.totalorder %s16, 7
    %p124 = por %p122, %p123
    %p125 = scmp.ne.s32.totalorder %s114, %s115
    %p126 = scmp.eq.s32.totalorder %s16, 0
    %p127 = por %p125, %p126
    %p128 = scmp.ne.s32.totalorder %s114, %s115
    %p129 = scmp.eq.s32.totalorder %s17, 7
    %p130 = por %p128, %p129
    %p132 = scmp.ne.s32.totalorder %s115, %s131
    %p133 = scmp.eq.s32.totalorder %s17, 0
    %p134 = por %p132, %p133
    %s135 = ssub.s32 %s18, %s44
    %s136 = ssub.s32 %s19, %s40
    %s137 = sor.u32 %s135, %s136
    %s138 = ssub.s32 %s21, %s32
    %s139 = sor.u32 %s137, %s138
    %p140 = scmp.eq.s32.totalorder %s139, 0
    %s142 = sadd.s32 %s141, 1
    %s143 = scalar_select %p140, %s141, %s142
    %p146 = pneg %p140
    %p147 = scmp.eq.s32.totalorder %s11, 7
    %p148 = por %p146, %p147
    %p149 = scmp.ne.s32.totalorder %s141, %s144
    %p150 = scmp.eq.s32.totalorder %s11, 0
    %p151 = por %p149, %p150
    %p152 = scmp.ne.s32.totalorder %s141, %s144
    %p153 = scmp.eq.s32.totalorder %s16, 7
    %p154 = por %p152, %p153
    %p155 = scmp.ne.s32.totalorder %s144, %s145
    %p156 = scmp.eq.s32.totalorder %s16, 0
    %p157 = por %p155, %p156
    %p158 = scmp.ne.s32.totalorder %s144, %s145
    %p159 = scmp.eq.s32.totalorder %s17, 7
    %p160 = por %p158, %p159
    %p162 = scmp.ne.s32.totalorder %s145, %s161
    %p163 = scmp.eq.s32.totalorder %s17, 0
    %p164 = por %p162, %p163
    %s165 = ssub.s32 %s18, %s44
    %s166 = ssub.s32 %s19, %s40
    %s167 = sor.u32 %s165, %s166
    %s168 = ssub.s32 %s21, %s32
    %s169 = sor.u32 %s167, %s168
    %p170 = scmp.eq.s32.totalorder %s169, 0
    %s172 = sadd.s32 %s171, 1
    %s173 = scalar_select %p170, %s171, %s172
    %p176 = pneg %p170
    %p177 = scmp.eq.s32.totalorder %s11, 7
    %p178 = por %p176, %p177
    %p179 = scmp.ne.s32.totalorder %s171, %s174
    %p180 = scmp.eq.s32.totalorder %s11, 0
    %p181 = por %p179, %p180
    %p182 = scmp.ne.s32.totalorder %s171, %s174
    %p183 = scmp.eq.s32.totalorder %s16, 7
    %p184 = por %p182, %p183
    %p185 = scmp.ne.s32.totalorder %s174, %s175
    %p186 = scmp.eq.s32.totalorder %s16, 0
    %p187 = por %p185, %p186
    %p188 = scmp.ne.s32.totalorder %s174, %s175
    %p189 = scmp.eq.s32.totalorder %s17, 7
    %p190 = por %p188, %p189
    %p192 = scmp.ne.s32.totalorder %s175, %s191
    %p193 = scmp.eq.s32.totalorder %s17, 0
    %p194 = por %p192, %p193
    %s195 = ssub.s32 %s18, %s44
    %s196 = ssub.s32 %s19, %s40
    %s197 = sor.u32 %s195, %s196
    %s198 = ssub.s32 %s20, %s36
    %s199 = sor.u32 %s197, %s198
    %p200 = scmp.eq.s32.totalorder %s199, 0
    %s202 = sadd.s32 %s201, 1
    %s203 = scalar_select %p200, %s201, %s202
    %p206 = pneg %p200
    %p207 = scmp.eq.s32.totalorder %s11, 7
    %p208 = por %p206, %p207
    %p209 = scmp.ne.s32.totalorder %s201, %s204
    %p210 = scmp.eq.s32.totalorder %s11, 0
    %p211 = por %p209, %p210
    %p212 = scmp.ne.s32.totalorder %s201, %s204
    %p213 = scmp.eq.s32.totalorder %s16, 7
    %p214 = por %p212, %p213
    %p215 = scmp.ne.s32.totalorder %s204, %s205
    %p216 = scmp.eq.s32.totalorder %s16, 0
    %p217 = por %p215, %p216
    %p218 = scmp.ne.s32.totalorder %s204, %s205
    %p219 = scmp.eq.s32.totalorder %s17, 7
    %p220 = por %p218, %p219
    %p222 = scmp.ne.s32.totalorder %s205, %s221
    %p223 = scmp.eq.s32.totalorder %s17, 0
    %p224 = por %p222, %p223
    %p225 = scmp.le.s32.totalorder 1, %s11
    %p226 = scmp.lt.s32.totalorder %s11, 9
    %p227 = pnand %p225, %p226
    %p228 = pneg %p227
    // Predicated region
    $region9: #{cocolm_attention.4} parent=5 // pred_check
      _
    $region10: #{cocolm_attention.4} parent=5 // pred_check_branch
      %230 = sbr.rel (%p227) target = $region12
    $region11: #{cocolm_attention.4} parent=5 // pred_region
      %s231 = ssub.s32 %s11, 1
    $region12: #{cocolm_attention.4} parent=5 // pred_fallthru
      _
    %p232 = scmp.lt.s32.totalorder %s11, 8
    // Predicated region
    $region13: #{cocolm_attention.4} parent=5 // pred_check
      %p233 = pneg %p232
    $region14: #{cocolm_attention.4} parent=5 // pred_check_branch
      %235 = sbr.rel (%p233) target = $region16
    $region15: #{cocolm_attention.4} parent=5 // pred_region
      // Predicated region
      $region17: #{cocolm_attention.4} parent=15 // pred_check
        %p236 = pneg %p59
      $region18: #{cocolm_attention.4} parent=15 // pred_check_branch
        %238 = sbr.rel (%p236) target = $region20
      $region19: #{cocolm_attention.4} parent=15 // pred_region
        %p239 = scmp.lt.s32.totalorder %s18, 1
        %s240 = scalar_select %p239, %s18, 1
        %p241 = scmp.lt.s32.totalorder %s21, 0
        %s242 = scalar_select %p241, %s21, 0
        %s243 = sadd.s32 %s242, %s240
        %s244 = scalar_lea.vmem %s0, %s243
      $region20: #{cocolm_attention.4} parent=15 // pred_fallthru
        _
      // Predicated region
      $region21: #{cocolm_attention.4} parent=15 // pred_check
        %p245 = pneg %p91
      $region22: #{cocolm_attention.4} parent=15 // pred_check_branch
        %247 = sbr.rel (%p245) target = $region24
      $region23: #{cocolm_attention.4} parent=15 // pred_region
        %p248 = scmp.lt.s32.totalorder %s18, 1
        %s249 = scalar_select %p248, %s18, 1
        %p250 = scmp.lt.s32.totalorder %s19, 3
        %s251 = scalar_select %p250, %s19, 3
        %p252 = scmp.lt.s32.totalorder %s20, 0
        %s253 = scalar_select %p252, %s20, 0
        %p254 = scmp.lt.s32.totalorder %s21, 0
        %s255 = scalar_select %p254, %s21, 0
        %s256 = sadd.s32 %s255, %s253
        %s257 = sadd.s32 %s256, %s251
        %s258 = smul.addr %s249, 4
        %s259 = sadd.s32 %s257, %s258
        %s260 = smul.addr %s259, 8
        %s261 = scalar_lea.vmem %s1, %s260
      $region24: #{cocolm_attention.4} parent=15 // pred_fallthru
        _
      // Predicated region
      $region25: #{cocolm_attention.4} parent=15 // pred_check
        %p262 = pneg %p121
      $region26: #{cocolm_attention.4} parent=15 // pred_check_branch
        %264 = sbr.rel (%p262) target = $region28
      $region27: #{cocolm_attention.4} parent=15 // pred_region
        %p265 = scmp.lt.s32.totalorder %s18, 1
        %s266 = scalar_select %p265, %s18, 1
        %p267 = scmp.lt.s32.totalorder %s19, 3
        %s268 = scalar_select %p267, %s19, 3
        %p269 = scmp.lt.s32.totalorder %s20, 0
        %s270 = scalar_select %p269, %s20, 0
        %s271 = sadd.s32 %s270, %s268
        %s272 = smul.addr %s266, 4
        %s273 = sadd.s32 %s271, %s272
        %s274 = smul.addr %s273, 8
        %s275 = scalar_lea.vmem %s2, %s274
      $region28: #{cocolm_attention.4} parent=15 // pred_fallthru
        _
      // Predicated region
      $region29: #{cocolm_attention.4} parent=15 // pred_check
        %p276 = pneg %p151
      $region30: #{cocolm_attention.4} parent=15 // pred_check_branch
        %278 = sbr.rel (%p276) target = $region32
      $region31: #{cocolm_attention.4} parent=15 // pred_region
        %p279 = scmp.lt.s32.totalorder %s18, 1
        %s280 = scalar_select %p279, %s18, 1
        %p281 = scmp.lt.s32.totalorder %s19, 3
        %s282 = scalar_select %p281, %s19, 3
        %p283 = scmp.lt.s32.totalorder %s21, 0
        %s284 = scalar_select %p283, %s21, 0
        %s285 = sadd.s32 %s284, %s282
        %s286 = smul.addr %s280, 4
        %s287 = sadd.s32 %s285, %s286
        %s288 = smul.addr %s287, 8
        %s289 = scalar_lea.vmem %s3, %s288
      $region32: #{cocolm_attention.4} parent=15 // pred_fallthru
        _
      // Predicated region
      $region33: #{cocolm_attention.4} parent=15 // pred_check
        %p290 = pneg %p181
      $region34: #{cocolm_attention.4} parent=15 // pred_check_branch
        %292 = sbr.rel (%p290) target = $region36
      $region35: #{cocolm_attention.4} parent=15 // pred_region
        %p293 = scmp.lt.s32.totalorder %s18, 1
        %s294 = scalar_select %p293, %s18, 1
        %p295 = scmp.lt.s32.totalorder %s19, 3
        %s296 = scalar_select %p295, %s19, 3
        %p297 = scmp.lt.s32.totalorder %s21, 0
        %s298 = scalar_select %p297, %s21, 0
        %s299 = sadd.s32 %s298, %s296
        %s300 = smul.addr %s294, 4
        %s301 = sadd.s32 %s299, %s300
        %s302 = smul.addr %s301, 8
        %s303 = scalar_lea.vmem %s4, %s302
      $region36: #{cocolm_attention.4} parent=15 // pred_fallthru
        _
    $region16: #{cocolm_attention.4} parent=5 // pred_fallthru
      _
    %p304 = scmp.le.s32.totalorder 1, %s11
    %p305 = scmp.lt.s32.totalorder %s11, 9
    %p306 = pnand %p304, %p305
    %p307 = pneg %p306
    // Predicated region
    $region37: #{cocolm_attention.4} parent=5 // pred_check
      _
    $region38: #{cocolm_attention.4} parent=5 // pred_check_branch
      %309 = sbr.rel (%p306) target = $region40
    $region39: #{cocolm_attention.4} parent=5 // pred_region
      %s310 = ssub.s32 %s11, 1
      %p311 = scmp.lt.s32.totalorder %s22, 1
      %s312 = scalar_select %p311, %s22, 1
      %p313 = scmp.lt.s32.totalorder %s25, 0
      %s314 = scalar_select %p313, %s25, 0
      %s315 = sadd.s32 %s314, %s312
      %s316 = scalar_lea.vmem %s0, %s315
      %p317 = pneg %p65
      %p318 = pneg %p62
      %p319 = scmp.lt.s32.totalorder %s22, 1
      %s320 = scalar_select %p319, %s22, 1
      %p321 = scmp.lt.s32.totalorder %s23, 3
      %s322 = scalar_select %p321, %s23, 3
      %p323 = scmp.lt.s32.totalorder %s24, 0
      %s324 = scalar_select %p323, %s24, 0
      %p325 = scmp.lt.s32.totalorder %s25, 0
      %s326 = scalar_select %p325, %s25, 0
      %s327 = sadd.s32 %s326, %s324
      %s328 = sadd.s32 %s327, %s322
      %s329 = smul.addr %s320, 4
      %s330 = sadd.s32 %s328, %s329
      %s331 = smul.addr %s330, 8
      %s332 = scalar_lea.vmem %s1, %s331
      %p333 = pneg %p97
      %p334 = pneg %p94
      %p335 = scmp.lt.s32.totalorder %s22, 1
      %s336 = scalar_select %p335, %s22, 1
      %p337 = scmp.lt.s32.totalorder %s23, 3
      %s338 = scalar_select %p337, %s23, 3
      %p339 = scmp.lt.s32.totalorder %s24, 0
      %s340 = scalar_select %p339, %s24, 0
      %s341 = sadd.s32 %s340, %s338
      %s342 = smul.addr %s336, 4
      %s343 = sadd.s32 %s341, %s342
      %s344 = smul.addr %s343, 8
      %s345 = scalar_lea.vmem %s2, %s344
      %p346 = pneg %p127
      %p347 = pneg %p124
      %p348 = scmp.lt.s32.totalorder %s22, 1
      %s349 = scalar_select %p348, %s22, 1
      %p350 = scmp.lt.s32.totalorder %s23, 3
      %s351 = scalar_select %p350, %s23, 3
      %p352 = scmp.lt.s32.totalorder %s25, 0
      %s353 = scalar_select %p352, %s25, 0
      %s354 = sadd.s32 %s353, %s351
      %s355 = smul.addr %s349, 4
      %s356 = sadd.s32 %s354, %s355
      %s357 = smul.addr %s356, 8
      %s358 = scalar_lea.vmem %s3, %s357
      %p359 = pneg %p157
      %p360 = pneg %p154
      %p361 = scmp.lt.s32.totalorder %s22, 1
      %s362 = scalar_select %p361, %s22, 1
      %p363 = scmp.lt.s32.totalorder %s23, 3
      %s364 = scalar_select %p363, %s23, 3
      %p365 = scmp.lt.s32.totalorder %s25, 0
      %s366 = scalar_select %p365, %s25, 0
      %s367 = sadd.s32 %s366, %s364
      %s368 = smul.addr %s362, 4
      %s369 = sadd.s32 %s367, %s368
      %s370 = smul.addr %s369, 8
      %s371 = scalar_lea.vmem %s4, %s370
      %p372 = pneg %p187
      %p373 = pneg %p184
      %p374 = pneg %p217
      %p375 = pneg %p214
      %p376 = scmp.lt.s32.totalorder %s22, 1
      %s377 = scalar_select %p376, %s22, 1
      %p378 = scmp.lt.s32.totalorder %s23, 3
      %s379 = scalar_select %p378, %s23, 3
      %p380 = scmp.lt.s32.totalorder %s24, 0
      %s381 = scalar_select %p380, %s24, 0
      %s382 = sadd.s32 %s381, %s379
      %s383 = smul.addr %s377, 4
      %s384 = sadd.s32 %s382, %s383
      %s385 = smul.addr %s384, 8
      %s386 = scalar_lea.vmem %s5, %s385
      %p387 = scmp.lt.s32.totalorder %s22, 1
      %s388 = scalar_select %p387, %s22, 1
      %p389 = scmp.lt.s32.totalorder %s25, 0
      %s390 = scalar_select %p389, %s25, 0
      %s391 = sadd.s32 %s390, %s388
      %s392 = scalar_lea.vmem %s0, %s391
      %p393 = scmp.lt.s32.totalorder %s22, 1
      %s394 = scalar_select %p393, %s22, 1
      %p395 = scmp.lt.s32.totalorder %s23, 3
      %s396 = scalar_select %p395, %s23, 3
      %p397 = scmp.lt.s32.totalorder %s24, 0
      %s398 = scalar_select %p397, %s24, 0
      %p399 = scmp.lt.s32.totalorder %s25, 0
      %s400 = scalar_select %p399, %s25, 0
      %s401 = sadd.s32 %s400, %s398
      %s402 = sadd.s32 %s401, %s396
      %s403 = smul.addr %s394, 4
      %s404 = sadd.s32 %s402, %s403
      %s405 = smul.addr %s404, 8
      %s406 = scalar_lea.vmem %s1, %s405
      %p407 = scmp.lt.s32.totalorder %s22, 1
      %s408 = scalar_select %p407, %s22, 1
      %p409 = scmp.lt.s32.totalorder %s23, 3
      %s410 = scalar_select %p409, %s23, 3
      %p411 = scmp.lt.s32.totalorder %s24, 0
      %s412 = scalar_select %p411, %s24, 0
      %s413 = sadd.s32 %s412, %s410
      %s414 = smul.addr %s408, 4
      %s415 = sadd.s32 %s413, %s414
      %s416 = smul.addr %s415, 8
      %s417 = scalar_lea.vmem %s2, %s416
      %p418 = scmp.lt.s32.totalorder %s22, 1
      %s419 = scalar_select %p418, %s22, 1
      %p420 = scmp.lt.s32.totalorder %s23, 3
      %s421 = scalar_select %p420, %s23, 3
      %p422 = scmp.lt.s32.totalorder %s25, 0
      %s423 = scalar_select %p422, %s25, 0
      %s424 = sadd.s32 %s423, %s421
      %s425 = smul.addr %s419, 4
      %s426 = sadd.s32 %s424, %s425
      %s427 = smul.addr %s426, 8
      %s428 = scalar_lea.vmem %s3, %s427
      %p429 = scmp.lt.s32.totalorder %s22, 1
      %s430 = scalar_select %p429, %s22, 1
      %p431 = scmp.lt.s32.totalorder %s23, 3
      %s432 = scalar_select %p431, %s23, 3
      %p433 = scmp.lt.s32.totalorder %s25, 0
      %s434 = scalar_select %p433, %s25, 0
      %s435 = sadd.s32 %s434, %s432
      %s436 = smul.addr %s430, 4
      %s437 = sadd.s32 %s435, %s436
      %s438 = smul.addr %s437, 8
      %s439 = scalar_lea.vmem %s4, %s438
      %p440 = scmp.lt.s32.totalorder %s22, 1
      %s441 = scalar_select %p440, %s22, 1
      %p442 = scmp.lt.s32.totalorder %s23, 3
      %s443 = scalar_select %p442, %s23, 3
      %p444 = scmp.lt.s32.totalorder %s24, 0
      %s445 = scalar_select %p444, %s24, 0
      %s446 = sadd.s32 %s445, %s443
      %s447 = smul.addr %s441, 4
      %s448 = sadd.s32 %s446, %s447
      %s449 = smul.addr %s448, 8
      %s450 = scalar_lea.vmem %s5, %s449
      %p451 = scmp.eq.s32.totalorder %s25, 0
      // Predicated region
      $region41: #{cocolm_attention.4} parent=39 // pred_check
        %p452 = pneg %p451
      $region42: #{cocolm_attention.4} parent=39 // pred_check_branch
        %454 = sbr.rel (%p452) target = $region44
      $region43: #{cocolm_attention.4} parent=39 // pred_region
        %vm455 = vcmask 7168
        %456 = vst.msk [vmem:[#allocation2] sm:$0xff] %vm455, -inf
        %457 = vst.msk [vmem:[#allocation3] sm:$0xff] %vm455, 0.0
        %vm458 = vcmask 64512
        %459 = vst.msk [vmem:[#allocation4] sm:$0xff] %vm458, 0.0
      $region44: #{cocolm_attention.4} parent=39 // pred_fallthru
        _
      %v460 = vld [vmem:[%s417] sm:$0xff]
      %v461 = vld [vmem:[%s428] sm:$0xff]
      %v462 = vld [vmem:[%s406] sm:$0xff]
      %vm463 = vcmask 64512
      %v465 = vsel %vm463, %v460, 0
      %v468 = vsel %vm463, %v461, 0
      %470 = vmatprep.subr.mxu0 0.0
      %471 = vmatpush1.xpose.msra.mxu0 %v468
      %472 = vmatprep.subr.mxu0 0.0
      %473 = vmatpush1.xpose.msra.mxu0 0.0
      %474 = vmatprep.subr.mxu0 0.0
      %475 = vmatpush1.xpose.msra.mxu0 0.0
      %476 = vmatprep.subr.mxu0 0.0
      %477 = vmatpush1.xpose.msra.mxu0 0.0
      %478 = vmatprep.subr.mxu0 0.0
      %479 = vmatpush1.xpose.msra.mxu0 0.0
      %480 = vmatprep.subr.mxu0 0.0
      %481 = vmatpush1.xpose.msra.mxu0 0.0
      %482 = vmatprep.subr.mxu0 0.0
      %483 = vmatpush1.xpose.msra.mxu0 0.0
      %484 = vmatprep.subr.mxu0 0.0
      %485 = vmatpush1.xpose.msra.mxu0 0.0
      %486 = vmatprep.subr.mxu0 0.0
      %487 = vmatpush1.xpose.msra.mxu0 0.0
      %488 = vmatprep.subr.mxu0 0.0
      %489 = vmatpush1.xpose.msra.mxu0 0.0
      %490 = vmatprep.subr.mxu0 0.0
      %491 = vmatpush1.xpose.msra.mxu0 0.0
      %492 = vmatprep.subr.mxu0 0.0
      %493 = vmatpush1.xpose.msra.mxu0 0.0
      %494 = vmatprep.subr.mxu0 0.0
      %495 = vmatpush1.xpose.msra.mxu0 0.0
      %496 = vmatprep.subr.mxu0 0.0
      %497 = vmatpush1.xpose.msra.mxu0 0.0
      %498 = vmatprep.subr.mxu0 0.0
      %499 = vmatpush1.xpose.msra.mxu0 0.0
      %500 = vmatprep.subr.mxu0 0.0
      %501 = vmatpush1.xpose.msra.mxu0 0.0
      %502 = vmatprep.subr.mxu0 0.0
      %503 = vmatpush1.xpose.msra.mxu0 0.0
      %504 = vmatprep.subr.mxu0 0.0
      %505 = vmatpush1.xpose.msra.mxu0 0.0
      %506 = vmatprep.subr.mxu0 0.0
      %507 = vmatpush1.xpose.msra.mxu0 0.0
      %508 = vmatprep.subr.mxu0 0.0
      %509 = vmatpush1.xpose.msra.mxu0 0.0
      %510 = vmatprep.subr.mxu0 0.0
      %511 = vmatpush1.xpose.msra.mxu0 0.0
      %512 = vmatprep.subr.mxu0 0.0
      %513 = vmatpush1.xpose.msra.mxu0 0.0
      %514 = vmatprep.subr.mxu0 0.0
      %515 = vmatpush1.xpose.msra.mxu0 0.0
      %516 = vmatprep.subr.mxu0 0.0
      %517 = vmatpush1.xpose.msra.mxu0 0.0
      %518 = vmatprep.subr.mxu0 0.0
      %519 = vmatpush1.xpose.msra.mxu0 0.0
      %520 = vmatprep.subr.mxu0 0.0
      %521 = vmatpush1.xpose.msra.mxu0 0.0
      %522 = vmatprep.subr.mxu0 0.0
      %523 = vmatpush1.xpose.msra.mxu0 0.0
      %524 = vmatprep.subr.mxu0 0.0
      %525 = vmatpush1.xpose.msra.mxu0 0.0
      %526 = vmatprep.subr.mxu0 0.0
      %527 = vmatpush1.xpose.msra.mxu0 0.0
      %528 = vmatprep.subr.mxu0 0.0
      %529 = vmatpush1.xpose.msra.mxu0 0.0
      %530 = vmatprep.subr.mxu0 0.0
      %531 = vmatpush1.xpose.msra.mxu0 0.0
      %532 = vmatprep.subr.mxu0 0.0
      %533 = vmatpush1.xpose.msra.mxu0 0.0
      %534 = vmatprep.mubr.f32.mxu0 0.0
      %535 = vmatmul.mubr.f32.gmra.mrb[0].mxu0 %v465
      %v536 = vpop.f32.mrb[0].mxu0
      %v537 = vadd.f32 %v462, %v536
      %v538 = vpop.f32.mrb[0].mxu0
      %539 = vdwg.mxu0
      %v540 = vld [vmem:[%s392] sm:$0x1]
      %vm541 = vcmp.ne.s32.totalorder %v540, 0
      %v542 = vsel %vm541, 1, 0
      %v543 = vlaneseq
      %v544 = vshrl.u32 %v543, 7
      %v545 = vsub.s32 0, %v544
      %v546 = vrot.slane %v542, %v545
      %vm547 = vcmp.eq.s32.totalorder %v546, 1
      %v548 = vsel %vm547, -inf, %v537
      %v549 = vld [vmem:[#allocation2] sm:$0xff]
      %v550 = vsel %vm463, %v548, -inf
      %551 = vmax.xlane.f32.xlu0 %v550
      %v552 = vpop.xlane.xlu0 %551
      %v553 = vmax.f32 %v549, %v552
      %vm554 = vcmp.eq.f32.partialorder %v553, -inf
      %v555 = vsel %vm554, 0.0, %v553
      %v556 = vsub.f32 %v549, %v555
      %v557 = vmul.f32 %v556, 1.442695
      %v558 = vpow.pop %v557
      %560 = vset.pattern.permute.xlu0 0
      %561 = vperm.xlu0 %560, %v555
      %v562 = vpop.permute.xlu0 %561
      %v564 = vsub.f32 %v548, %v562
      %v565 = vmul.f32 %v564, 1.442695
      %v566 = vpow.pop %v565
      %v567 = vld [vmem:[#allocation3] sm:$0xff]
      %v568 = vmul.f32 %v558, %v567
      %v569 = vsel %vm463, %v566, 0.0
      %570 = vadd.xlane.f32.xlu0 %v569
      %v571 = vpop.xlane.xlu0 %570
      %v572 = vadd.f32 %v568, %v571
      %vm573 = vcmask 7168
      %574 = vst.msk [vmem:[#allocation3] sm:$0xff] %vm573, %v572
      %v575 = vld [vmem:[#allocation4] sm:$0xff]
      %577 = vset.pattern.permute.xlu0 0
      %578 = vperm.xlu0 %577, %v558
      %v579 = vpop.permute.xlu0 %578
      %v581 = vmul.f32 %v579, %v575
      %v582 = vld [vmem:[%s439] sm:$0xff]
      %v584 = vsel %vm463, %v566, 0
      %586 = vmatprep.subr.mxu0 0.0
      %587 = vmatpush1.msra.mxu0 %v582
      %588 = vmatprep.subr.mxu0 0.0
      %589 = vmatpush1.msra.mxu0 0.0
      %590 = vmatprep.subr.mxu0 0.0
      %591 = vmatpush1.msra.mxu0 0.0
      %592 = vmatprep.subr.mxu0 0.0
      %593 = vmatpush1.msra.mxu0 0.0
      %594 = vmatprep.subr.mxu0 0.0
      %595 = vmatpush1.msra.mxu0 0.0
      %596 = vmatprep.subr.mxu0 0.0
      %597 = vmatpush1.msra.mxu0 0.0
      %598 = vmatprep.subr.mxu0 0.0
      %599 = vmatpush1.msra.mxu0 0.0
      %600 = vmatprep.subr.mxu0 0.0
      %601 = vmatpush1.msra.mxu0 0.0
      %602 = vmatprep.subr.mxu0 0.0
      %603 = vmatpush1.msra.mxu0 0.0
      %604 = vmatprep.subr.mxu0 0.0
      %605 = vmatpush1.msra.mxu0 0.0
      %606 = vmatprep.subr.mxu0 0.0
      %607 = vmatpush1.msra.mxu0 0.0
      %608 = vmatprep.subr.mxu0 0.0
      %609 = vmatpush1.msra.mxu0 0.0
      %610 = vmatprep.subr.mxu0 0.0
      %611 = vmatpush1.msra.mxu0 0.0
      %612 = vmatprep.subr.mxu0 0.0
      %613 = vmatpush1.msra.mxu0 0.0
      %614 = vmatprep.subr.mxu0 0.0
      %615 = vmatpush1.msra.mxu0 0.0
      %616 = vmatprep.subr.mxu0 0.0
      %617 = vmatpush1.msra.mxu0 0.0
      %618 = vmatprep.subr.mxu0 0.0
      %619 = vmatpush1.msra.mxu0 0.0
      %620 = vmatprep.subr.mxu0 0.0
      %621 = vmatpush1.msra.mxu0 0.0
      %622 = vmatprep.subr.mxu0 0.0
      %623 = vmatpush1.msra.mxu0 0.0
      %624 = vmatprep.subr.mxu0 0.0
      %625 = vmatpush1.msra.mxu0 0.0
      %626 = vmatprep.subr.mxu0 0.0
      %627 = vmatpush1.msra.mxu0 0.0
      %628 = vmatprep.subr.mxu0 0.0
      %629 = vmatpush1.msra.mxu0 0.0
      %630 = vmatprep.subr.mxu0 0.0
      %631 = vmatpush1.msra.mxu0 0.0
      %632 = vmatprep.subr.mxu0 0.0
      %633 = vmatpush1.msra.mxu0 0.0
      %634 = vmatprep.subr.mxu0 0.0
      %635 = vmatpush1.msra.mxu0 0.0
      %636 = vmatprep.subr.mxu0 0.0
      %637 = vmatpush1.msra.mxu0 0.0
      %638 = vmatprep.subr.mxu0 0.0
      %639 = vmatpush1.msra.mxu0 0.0
      %640 = vmatprep.subr.mxu0 0.0
      %641 = vmatpush1.msra.mxu0 0.0
      %642 = vmatprep.subr.mxu0 0.0
      %643 = vmatpush1.msra.mxu0 0.0
      %644 = vmatprep.subr.mxu0 0.0
      %645 = vmatpush1.msra.mxu0 0.0
      %646 = vmatprep.subr.mxu0 0.0
      %647 = vmatpush1.msra.mxu0 0.0
      %648 = vmatprep.subr.mxu0 0.0
      %649 = vmatpush1.msra.mxu0 0.0
      %650 = vmatprep.mubr.f32.mxu0 0.0
      %651 = vmatmul.mubr.f32.gmra.mrb[0].mxu0 %v584
      %v652 = vpop.f32.mrb[0].mxu0
      %v653 = vadd.f32 0.0, %v652
      %v654 = vpop.f32.mrb[0].mxu0
      %655 = vdwg.mxu0
      %v656 = vadd.f32 %v581, %v653
      %657 = vst.msk [vmem:[#allocation4] sm:$0xff] %vm463, %v656
      %658 = vst.msk [vmem:[#allocation2] sm:$0xff] %vm573, %v553
      // Predicated region
      $region45: #{cocolm_attention.4} parent=39 // pred_check
        %p659 = pneg %p451
      $region46: #{cocolm_attention.4} parent=39 // pred_check_branch
        %661 = sbr.rel (%p659) target = $region48
      $region47: #{cocolm_attention.4} parent=39 // pred_region
        %v662 = vld [vmem:[#allocation3] sm:$0xff]
        %v663 = vrcp.pop %v662
        %v664 = vld [vmem:[#allocation4] sm:$0xff]
        %666 = vset.pattern.permute.xlu0 0
        %667 = vperm.xlu0 %666, %v663
        %v668 = vpop.permute.xlu0 %667
        %v670 = vmul.f32 %v664, %v668
        %671 = vst.msk [vmem:[%s450] sm:$0xff] %vm463, %v670
      $region48: #{cocolm_attention.4} parent=39 // pred_fallthru
        _
      %p672 = scmp.lt.s32.totalorder %s22, 1
      %s673 = scalar_select %p672, %s22, 1
      %p674 = scmp.lt.s32.totalorder %s23, 3
      %s675 = scalar_select %p674, %s23, 3
      %p676 = scmp.lt.s32.totalorder %s24, 0
      %s677 = scalar_select %p676, %s24, 0
      %s678 = sadd.s32 %s677, %s675
      %s679 = smul.addr %s673, 4
      %s680 = sadd.s32 %s678, %s679
      %s681 = smul.addr %s680, 8
      %s682 = scalar_lea.vmem %s5, %s681
      // Predicated region
      $region49: #{cocolm_attention.4} parent=39 // pred_check
        %p683 = pneg %p214
      $region50: #{cocolm_attention.4} parent=39 // pred_check_branch
        %685 = sbr.rel (%p683) target = $region52
      $region51: #{cocolm_attention.4} parent=39 // pred_region
        _
      $region52: #{cocolm_attention.4} parent=39 // pred_fallthru
        _
    $region40: #{cocolm_attention.4} parent=5 // pred_fallthru
      _
    %p686 = scmp.le.s32.totalorder 2, %s11
    // Predicated region
    $region53: #{cocolm_attention.4} parent=5 // pred_check
      %p687 = pneg %p686
    $region54: #{cocolm_attention.4} parent=5 // pred_check_branch
      %689 = sbr.rel (%p687) target = $region56
    $region55: #{cocolm_attention.4} parent=5 // pred_region
      %s690 = ssub.s32 %s11, 2
      // Predicated region
      $region57: #{cocolm_attention.4} parent=55 // pred_check
        %p691 = pneg %p220
      $region58: #{cocolm_attention.4} parent=55 // pred_check_branch
        %693 = sbr.rel (%p691) target = $region60
      $region59: #{cocolm_attention.4} parent=55 // pred_region
        %p694 = scmp.lt.s32.totalorder %s26, 1
        %s695 = scalar_select %p694, %s26, 1
        %p696 = scmp.lt.s32.totalorder %s27, 3
        %s697 = scalar_select %p696, %s27, 3
        %p698 = scmp.lt.s32.totalorder %s28, 0
        %s699 = scalar_select %p698, %s28, 0
        %s700 = sadd.s32 %s699, %s697
        %s701 = smul.addr %s695, 4
        %s702 = sadd.s32 %s700, %s701
        %s703 = smul.addr %s702, 8
        %s704 = scalar_lea.vmem %s5, %s703
      $region60: #{cocolm_attention.4} parent=55 // pred_fallthru
        _
    $region56: #{cocolm_attention.4} parent=5 // pred_fallthru
      _
  $region6: #{cocolm_attention.4} parent=0 // loop_footer
    %s15 = sadd.s32 1, %s11
  $region7: #{cocolm_attention.4} parent=0 // loop_footer_branch
    %10 = sbr.rel target = $region3
  $region8: #{cocolm_attention.4} parent=0 // loop_exit
    _

// kernel: cocolm_attention.5
$region0: #{cocolm_attention.5}
  #allocation0 [shape = 'u32[]', space=smem, size = 0x4, offset = 0x4, fixed_abs, tag = 'smem constant byte address 0x4 - core index']
  #allocation1 [shape = 'u32[144,128]{1,0:T(1,128)}', space=vmem, size = 0x12000, scoped, tag = 'internal scratch']
  %s0 = inlined_call_operand.vmem [shape: f32[16,32], index: 0, kind: input, shape index: {}]
  %s1 = inlined_call_operand.vmem [shape: f32[32,32], index: 1, kind: input, shape index: {}]
  %s2 = inlined_call_operand.vmem [shape: f32[1,32], index: 2, kind: input, shape index: {}]
  %s3 = inlined_call_operand.vmem [shape: f32[16,32], index: 3, kind: input, shape index: {}]
  %s4 = inlined_call_operand.vmem [shape: f32[1,32], index: 4, kind: input, shape index: {}]
  %s5 = inlined_call_operand.vmem [shape: f32[1,32], index: 5, kind: input, shape index: {}]
  %s6 = inlined_call_operand.hbm [shape: f32[16,32], index: 6, kind: output, shape index: {}]
  %s7 = sld [smem:[#allocation0]]
  $region34: #{cocolm_attention.5} parent=0
    _
  %s9 = ssub.s32 1, %s7
  %s10 = scalar_select 0, %s9, %s7
  $region1: #{cocolm_attention.5} parent=0
    #allocation2 [shape = 'u8[8192]{0}', space=vmem, size = 0x2000, scoped, tag = 'output window, operand 0, single buffered']
    #allocation3 [shape = 's32[1]{0}', space=sflag, size = 0x4, scoped, tag = 'scoped memory for cocolm_attention.5']
    %11 = vsyncpa [#allocation3], 0
    // Predicated region
    $region2: #{cocolm_attention.5} parent=1 // pred_check
      _
    $region3: #{cocolm_attention.5} parent=1 // pred_check_branch
      %13 = sbr.rel (0) target = $region5
    $region4: #{cocolm_attention.5} parent=1 // pred_region
      _
    $region5: #{cocolm_attention.5} parent=1 // pred_fallthru
      _
    // Predicated region
    $region6: #{cocolm_attention.5} parent=1 // pred_check
      _
    $region7: #{cocolm_attention.5} parent=1 // pred_check_branch
      %15 = sbr.rel (0) target = $region9
    $region8: #{cocolm_attention.5} parent=1 // pred_region
      _
    $region9: #{cocolm_attention.5} parent=1 // pred_fallthru
      _
    // Predicated region
    $region10: #{cocolm_attention.5} parent=1 // pred_check
      _
    $region11: #{cocolm_attention.5} parent=1 // pred_check_branch
      %17 = sbr.rel (0) target = $region13
    $region12: #{cocolm_attention.5} parent=1 // pred_region
      _
    $region13: #{cocolm_attention.5} parent=1 // pred_fallthru
      _
    // Predicated region
    $region14: #{cocolm_attention.5} parent=1 // pred_check
      _
    $region15: #{cocolm_attention.5} parent=1 // pred_check_branch
      %19 = sbr.rel (0) target = $region17
    $region16: #{cocolm_attention.5} parent=1 // pred_region
      _
    $region17: #{cocolm_attention.5} parent=1 // pred_fallthru
      _
    // Predicated region
    $region18: #{cocolm_attention.5} parent=1 // pred_check
      _
    $region19: #{cocolm_attention.5} parent=1 // pred_check_branch
      %21 = sbr.rel (0) target = $region21
    $region20: #{cocolm_attention.5} parent=1 // pred_region
      _
    $region21: #{cocolm_attention.5} parent=1 // pred_fallthru
      _
    // Predicated region
    $region22: #{cocolm_attention.5} parent=1 // pred_check
      _
    $region23: #{cocolm_attention.5} parent=1 // pred_check_branch
      %23 = sbr.rel (0) target = $region25
    $region24: #{cocolm_attention.5} parent=1 // pred_region
      _
    $region25: #{cocolm_attention.5} parent=1 // pred_fallthru
      _
    %v24 = vld [vmem:[%s0] sm:$0xff]
    %v25 = vld [vmem:[%s0 + $0x8] sm:$0xff]
    %v26 = vld [vmem:[%s1] sm:$0xff]
    %v27 = vld [vmem:[%s1 + $0x8] sm:$0xff]
    %v28 = vld [vmem:[%s1 + $0x10] sm:$0xff]
    %v29 = vld [vmem:[%s1 + $0x18] sm:$0xff]
    %v30 = vld [vmem:[%s2] sm:$0x1]
    %v32 = vlaneseq
    %v33 = vshrl.u32 %v32, 7
    %v34 = vsub.s32 0, %v33
    %v35 = vrot.slane %v30, %v34
    %vm37 = vcmask 261120
    %v39 = vsel %vm37, %v24, 0
    %v42 = vsel %vm37, %v25, 0
    %v45 = vsel %vm37, %v26, 0
    %v48 = vsel %vm37, %v27, 0
    %v51 = vsel %vm37, %v28, 0
    %v54 = vsel %vm37, %v29, 0
    %56 = vmatprep.subr.mxu0 0.0
    %57 = vmatpush1.xpose.msra.mxu0 %v45
    %58 = vmatprep.subr.mxu0 0.0
    %59 = vmatpush1.xpose.msra.mxu0 %v48
    %60 = vmatprep.subr.mxu0 0.0
    %61 = vmatpush1.xpose.msra.mxu0 %v51
    %62 = vmatprep.subr.mxu0 0.0
    %63 = vmatpush1.xpose.msra.mxu0 %v54
    %64 = vmatprep.subr.mxu0 0.0
    %65 = vmatpush1.xpose.msra.mxu0 0.0
    %66 = vmatprep.subr.mxu0 0.0
    %67 = vmatpush1.xpose.msra.mxu0 0.0
    %68 = vmatprep.subr.mxu0 0.0
    %69 = vmatpush1.xpose.msra.mxu0 0.0
    %70 = vmatprep.subr.mxu0 0.0
    %71 = vmatpush1.xpose.msra.mxu0 0.0
    %72 = vmatprep.subr.mxu0 0.0
    %73 = vmatpush1.xpose.msra.mxu0 0.0
    %74 = vmatprep.subr.mxu0 0.0
    %75 = vmatpush1.xpose.msra.mxu0 0.0
    %76 = vmatprep.subr.mxu0 0.0
    %77 = vmatpush1.xpose.msra.mxu0 0.0
    %78 = vmatprep.subr.mxu0 0.0
    %79 = vmatpush1.xpose.msra.mxu0 0.0
    %80 = vmatprep.subr.mxu0 0.0
    %81 = vmatpush1.xpose.msra.mxu0 0.0
    %82 = vmatprep.subr.mxu0 0.0
    %83 = vmatpush1.xpose.msra.mxu0 0.0
    %84 = vmatprep.subr.mxu0 0.0
    %85 = vmatpush1.xpose.msra.mxu0 0.0
    %86 = vmatprep.subr.mxu0 0.0
    %87 = vmatpush1.xpose.msra.mxu0 0.0
    %88 = vmatprep.subr.mxu0 0.0
    %89 = vmatpush1.xpose.msra.mxu0 0.0
    %90 = vmatprep.subr.mxu0 0.0
    %91 = vmatpush1.xpose.msra.mxu0 0.0
    %92 = vmatprep.subr.mxu0 0.0
    %93 = vmatpush1.xpose.msra.mxu0 0.0
    %94 = vmatprep.subr.mxu0 0.0
    %95 = vmatpush1.xpose.msra.mxu0 0.0
    %96 = vmatprep.subr.mxu0 0.0
    %97 = vmatpush1.xpose.msra.mxu0 0.0
    %98 = vmatprep.subr.mxu0 0.0
    %99 = vmatpush1.xpose.msra.mxu0 0.0
    %100 = vmatprep.subr.mxu0 0.0
    %101 = vmatpush1.xpose.msra.mxu0 0.0
    %102 = vmatprep.subr.mxu0 0.0
    %103 = vmatpush1.xpose.msra.mxu0 0.0
    %104 = vmatprep.subr.mxu0 0.0
    %105 = vmatpush1.xpose.msra.mxu0 0.0
    %106 = vmatprep.subr.mxu0 0.0
    %107 = vmatpush1.xpose.msra.mxu0 0.0
    %108 = vmatprep.subr.mxu0 0.0
    %109 = vmatpush1.xpose.msra.mxu0 0.0
    %110 = vmatprep.subr.mxu0 0.0
    %111 = vmatpush1.xpose.msra.mxu0 0.0
    %112 = vmatprep.subr.mxu0 0.0
    %113 = vmatpush1.xpose.msra.mxu0 0.0
    %114 = vmatprep.subr.mxu0 0.0
    %115 = vmatpush1.xpose.msra.mxu0 0.0
    %116 = vmatprep.subr.mxu0 0.0
    %117 = vmatpush1.xpose.msra.mxu0 0.0
    %118 = vmatprep.subr.mxu0 0.0
    %119 = vmatpush1.xpose.msra.mxu0 0.0
    %120 = vmatprep.mubr.f32.mxu0 0.0
    %121 = vmatmul.mubr.f32.gmra.mrb[0].mxu0 %v39
    %v122 = vpop.f32.mrb[0].mxu0
    %v123 = vadd.f32 %v35, %v122
    %v124 = vpop.f32.mrb[0].mxu0
    %125 = vmatprep.mubr.f32.mxu0 0.0
    %126 = vmatmul.mubr.f32.gmra.mrb[0].mxu0 %v42
    %v127 = vpop.f32.mrb[0].mxu0
    %v128 = vadd.f32 %v35, %v127
    %v129 = vpop.f32.mrb[0].mxu0
    %130 = vdwg.mxu0
    %vm131 = vcmp.ne.f32.partialorder %v123, %v123
    %vm132 = vcmp.ne.f32.partialorder %v128, %v128
    %v133 = vsel %vm131, 0.0, %v123
    %v134 = vsel %vm132, 0.0, %v128
    %v135 = vld [vmem:[%s3] sm:$0xff]
    %v136 = vld [vmem:[%s3 + $0x8] sm:$0xff]
    %v137 = vadd.f32 %v135, %v133
    %v138 = vadd.f32 %v136, %v134
    %v139 = vsel %vm37, %v137, 0.0
    %140 = vadd.xlane.f32.xlu0 %v139
    %v141 = vpop.xlane.xlu0 %140
    %v142 = vsel %vm37, %v138, 0.0
    %143 = vadd.xlane.f32.xlu0 %v142
    %v144 = vpop.xlane.xlu0 %143
    %v145 = vrcp.pop 32.0
    %v146 = vmul.f32 %v141, %v145
    %v147 = vmul.f32 %v144, %v145
    %v148 = vsub.f32 %v137, %v146
    %v149 = vsub.f32 %v138, %v147
    %v150 = vmul.f32 %v148, %v148
    %v151 = vmul.f32 %v149, %v149
    %v152 = vsel %vm37, %v150, 0.0
    %153 = vadd.xlane.f32.xlu0 %v152
    %v154 = vpop.xlane.xlu0 %153
    %v155 = vsel %vm37, %v151, 0.0
    %156 = vadd.xlane.f32.xlu0 %v155
    %v157 = vpop.xlane.xlu0 %156
    %v158 = vmul.f32 %v154, %v145
    %v159 = vmul.f32 %v157, %v145
    %v160 = vadd.f32 %v158, 1e-05
    %v161 = vadd.f32 %v159, 1e-05
    %v162 = vrsqrt.pop %v160
    %v163 = vrsqrt.pop %v161
    %v164 = vmul.f32 %v148, %v162
    %v165 = vmul.f32 %v149, %v163
    %v166 = vld [vmem:[%s4] sm:$0x1]
    %v168 = vlaneseq
    %v169 = vshrl.u32 %v168, 7
    %v170 = vsub.s32 0, %v169
    %v171 = vrot.slane %v166, %v170
    %v173 = vmul.f32 %v164, %v171
    %v174 = vmul.f32 %v165, %v171
    %v175 = vld [vmem:[%s5] sm:$0x1]
    %v177 = vlaneseq
    %v178 = vshrl.u32 %v177, 7
    %v179 = vsub.s32 0, %v178
    %v180 = vrot.slane %v175, %v179
    %v182 = vadd.f32 %v173, %v180
    %v183 = vadd.f32 %v174, %v180
    %184 = vst.msk [vmem:[#allocation2] sm:$0xff] %vm37, %v182
    %185 = vst.msk [vmem:[#allocation2 + $0x8] sm:$0xff] %vm37, %v183
    // Predicated region
    $region26: #{cocolm_attention.5} parent=1 // pred_check
      _
    $region27: #{cocolm_attention.5} parent=1 // pred_check_branch
      %187 = sbr.rel (0) target = $region29
    $region28: #{cocolm_attention.5} parent=1 // pred_region
      %s189 = ssub.s32 256, 256
      %190 = vsyncadd [#allocation3], %s189
      %s191 = sshll.u32 [#allocation2], 4
      %s192 = int_to_ptr.vmem [resolvable:$true] %s191
      %197 = dma.vmem_to_hbm [thread:$0]  %s192, 256, %s6, [#allocation3], 128, 128, 8
    $region29: #{cocolm_attention.5} parent=1 // pred_fallthru
      _
    // Predicated region
    $region30: #{cocolm_attention.5} parent=1 // pred_check
      _
    $region31: #{cocolm_attention.5} parent=1 // pred_check_branch
      %199 = sbr.rel (0) target = $region33
    $region32: #{cocolm_attention.5} parent=1 // pred_region
      %200 = dma.done [#allocation3], 256
    $region33: #{cocolm_attention.5} parent=1 // pred_fallthru
      _
    %201 = vsyncpa [#allocation3], 1

</llo_original>
